<compile_context>
chip_gen: v5e
topology: v5e:2x2
jax: 0.10.0
libtpu: 0.0.40
codegen_flags: <defaults>
</compile_context>

<pallas_src>
import functools

import jax
import jax.numpy as jnp
from jax.experimental import pallas as pl
from jax.experimental.pallas import tpu as pltpu


def _round_up(n, m):
    return ((n + m - 1) // m) * m


def _peak_tiling(total_peaks, *, lane=128, max_tile=512):
    lane_p = _round_up(total_peaks, lane)
    tp = min(max_tile, lane_p)
    return tp, _round_up(total_peaks, tp)


def _batch_tiling(batch, batch_tile):
    b8 = _round_up(batch, 8)
    if b8 >= batch_tile:
        return batch_tile, _round_up(batch, batch_tile)
    # Small batch: keep >= 2 grid steps when possible so both v7x TensorCores get
    # work on the "parallel" batch axis.
    if b8 >= 16:
        tb = _round_up(b8 // 2, 8)
        return tb, 2 * tb
    return b8, b8


# ----------------------------------------------------------------------------
# Pallas kernel.
# Grid = (batch tiles [parallel], peak strips [arbitrary, reduction]).
# acc_ref is an f32 VMEM accumulator for the pre-activation x_cat.
# ----------------------------------------------------------------------------
def _net_gcn_kernel(x_ref, wbig_ref, seg_ref, bsub_ref, ahT_ref, wgcn_ref,
                    bgcn_ref, wout_ref, bout_ref, out_ref, acc_ref, *, gene_dim):
    k = pl.program_id(1)

    @pl.when(k == 0)
    def _():
        acc_ref[...] = jnp.zeros_like(acc_ref)

    # subNet stage, factored: z[b, p] = sum_t x[b, t, p] * w_big[t, p]   (f32 on VPU)
    z = jnp.sum(x_ref[...] * wbig_ref[...][None, :, :], axis=1)          # (TB, tp)

    # peak -> gene segment-sum as a one-hot matmul strip; f32 accumulation.
    acc_ref[...] += jnp.dot(z.astype(jnp.bfloat16), seg_ref[...],
                            preferred_element_type=jnp.float32)          # (TB, Gp)

    @pl.when(k == pl.num_programs(1) - 1)
    def _():
        gp = acc_ref.shape[1]
        x_cat = jnp.maximum(acc_ref[...] + bsub_ref[...], 0.0)           # cat ReLU

        # GCN aggregation (no self-loops): agg = x_cat @ A_hat^T.
        agg = jnp.dot(x_cat.astype(jnp.bfloat16), ahT_ref[...],
                      preferred_element_type=jnp.float32)                # (TB, Gp)

        # GCNConv lin (1 -> gene_dim) scalar scale + bias + ReLU, folded into the
        # output Linear as a gene_dim-step accumulate over static w_out row blocks.
        out_val = bout_ref[...]                                          # (1, Op)
        for d in range(gene_dim):
            h_d = jnp.maximum(agg * wgcn_ref[d] + bgcn_ref[d], 0.0)      # (TB, Gp)
            out_val = out_val + jnp.dot(
                h_d.astype(jnp.bfloat16), wout_ref[d * gp:(d + 1) * gp, :],
                preferred_element_type=jnp.float32)
        out_ref[...] = out_val                                           # (TB, Op)


def net_gcn_forward(x, kp, num_output, *, batch_tile=256):
    """x: (B, num_tf, total_peaks) f32; kp: packed/padded kernel params."""
    B, T, P = x.shape
    Pp, Gp = kp["seg"].shape
    Op = kp["b_out"].shape[1]
    gene_dim = kp["w_gcn"].shape[0]
    tp = min(512, Pp)            # consistent with _peak_tiling used when packing

    TB, Bp = _batch_tiling(B, batch_tile)
    x_p = x
    if Bp > B or Pp > P:
        x_p = jnp.pad(x, ((0, Bp - B), (0, 0), (0, Pp - P)))   # zero pad, stays f32

    grid = (Bp // TB, Pp // tp)

    # Explicit VMEM budget: resident weights (counted double for safety) +
    # double-buffered x / w_big / seg strips + output tiles + f32 accumulator.
    resident = Gp * 4 + Gp * Gp * 2 + gene_dim * Gp * Op * 2 + Op * 4
    pipelined = 2 * (TB * T * tp * 4 + T * tp * 4 + tp * Gp * 2 + TB * Op * 4)
    scratch = TB * Gp * 4
    vmem_bytes = int(min(max(2 * resident + pipelined + scratch + (4 << 20),
                             16 << 20), 64 << 20))

    smem = pltpu.MemorySpace.SMEM
    kernel = functools.partial(_net_gcn_kernel, gene_dim=gene_dim)

    def make_specs(single_buffer_weights):
        res_kw = (dict(pipeline_mode=pl.Buffered(1))
                  if single_buffer_weights else {})
        return [
            pl.BlockSpec((TB, T, tp), lambda i, k: (i, 0, k)),            # x strip (f32)
            pl.BlockSpec((T, tp), lambda i, k: (0, k)),                   # w_big strip
            pl.BlockSpec((tp, Gp), lambda i, k: (k, 0)),                  # seg strip (bf16)
            pl.BlockSpec((1, Gp), lambda i, k: (0, 0), **res_kw),         # b_sub (resident)
            pl.BlockSpec((Gp, Gp), lambda i, k: (0, 0), **res_kw),        # A_hat^T (resident)
            pl.BlockSpec(memory_space=smem),                              # w_gcn scalars
            pl.BlockSpec(memory_space=smem),                              # b_gcn scalars
            pl.BlockSpec((gene_dim * Gp, Op), lambda i, k: (0, 0), **res_kw),  # w_out
            pl.BlockSpec((1, Op), lambda i, k: (0, 0), **res_kw),         # b_out (resident)
        ]

    def run(single_buffer_weights):
        return pl.pallas_call(
            kernel,
            out_shape=jax.ShapeDtypeStruct((Bp, Op), jnp.float32),
            grid=grid,
            in_specs=make_specs(single_buffer_weights),
            out_specs=pl.BlockSpec((TB, Op), lambda i, k: (i, 0)),
            scratch_shapes=[pltpu.VMEM((TB, Gp), jnp.float32)],
            compiler_params=pltpu.CompilerParams(
                dimension_semantics=("parallel", "arbitrary"),
                vmem_limit_bytes=vmem_bytes),
        )(x_p, kp["w_big"], kp["seg"], kp["b_sub"], kp["ahT"],
          kp["w_gcn"], kp["b_gcn"], kp["w_out2d"], kp["b_out"])

    try:
        out = run(True)
    except Exception:
        # Compatibility fallback for jax versions without BlockSpec.pipeline_mode /
        # single-buffering support; same kernel, default double buffering.
        out = run(False)

    return out[:B, :num_output]


# ----------------------------------------------------------------------------
# Parameter construction (mirrors Net_GCN.__init__ shapes) + kernel packing.
# ----------------------------------------------------------------------------
def init_params(key, num_genes, peaks_per_gene, num_tf, gene_dim, num_output):
    total_peaks = int(sum(peaks_per_gene))
    ks = jax.random.split(key, 6)

    # subNet fc1 weights: W_big[:, cut[i]:cut[i+1]] = fc1_i.weight.reshape(T, P_i)
    w_big = 0.1 * jax.random.normal(ks[0], (num_tf, total_peaks), jnp.float32)
    b_sub = 0.1 * jax.random.normal(ks[1], (1, num_genes), jnp.float32)

    # Undirected ring graph among genes; GCN norm D^{-1/2} A D^{-1/2}, no self-loops.
    src = jnp.arange(num_genes)
    dst = (src + 1) % num_genes
    A = jnp.zeros((num_genes, num_genes), jnp.float32)
    A = A.at[dst, src].set(1.0).at[src, dst].set(1.0)
    deg = jnp.sum(A, axis=1)
    dinv = jnp.where(deg > 0, 1.0 / jnp.sqrt(deg), 0.0)
    a_hat = dinv[:, None] * A * dinv[None, :]

    # GCNConv.lin weight (gene_dim, 1): row0 const in [0.1, 2.1], row1 ~ U(-2, 2).
    w0 = 2.0 * jax.random.uniform(ks[2], ()) + 0.1
    w1 = jax.random.uniform(ks[3], (), minval=-2.0, maxval=2.0)
    w_gcn = jnp.stack([w0, w1]).astype(jnp.float32)            # (gene_dim,)
    b_gcn = jnp.zeros((gene_dim,), jnp.float32)                # GCNConv bias

    # Output Linear(num_genes*gene_dim, num_output).
    w_out_full = 0.1 * jax.random.normal(
        ks[4], (num_output, num_genes * gene_dim), jnp.float32)
    b_out = 0.1 * jax.random.normal(ks[5], (1, num_output), jnp.float32)

    return dict(w_big=w_big, b_sub=b_sub, a_hat=a_hat, w_gcn=w_gcn, b_gcn=b_gcn,
                w_out_full=w_out_full, b_out=b_out)


def pack_kernel_params(p, peaks_per_gene, *, lane=128):
    """Zero-pad + bf16-pack parameters into lane-dense matmul operands."""
    num_tf, total_peaks = p["w_big"].shape
    num_genes = p["a_hat"].shape[0]
    num_output = p["b_out"].shape[1]
    gene_dim = p["w_gcn"].shape[0]

    tp, Pp = _peak_tiling(total_peaks, lane=lane)
    del tp
    Gp = _round_up(num_genes, lane)
    Op = _round_up(num_output, lane)

    # Padded subNet weights (f32) -- used by the in-kernel VPU TF-reduction,
    # NOT fused into a (T*P, G) Kronecker weight.
    w_big = jnp.zeros((num_tf, Pp), jnp.float32).at[:, :total_peaks].set(p["w_big"])

    # One-hot peak -> gene map (exact in bf16); padded rows/cols stay zero.
    seg = jnp.zeros((Pp, Gp), jnp.float32)
    off = 0
    for g, npk in enumerate(peaks_per_gene):
        seg = seg.at[off:off + npk, g].set(1.0)
        off += npk

    b_sub = jnp.zeros((1, Gp), jnp.float32).at[:, :num_genes].set(p["b_sub"])
    ahT = jnp.zeros((Gp, Gp), jnp.float32).at[
        :num_genes, :num_genes].set(p["a_hat"].T)

    # w_out2d[d*Gp + g, o] = w_out_full[o, g*gene_dim + d]  (d-major row blocks).
    w3 = p["w_out_full"].reshape(num_output, num_genes, gene_dim)    # (O, G, D)
    w_dgo = jnp.transpose(w3, (2, 1, 0))                             # (D, G, O)
    w_out2d = jnp.zeros((gene_dim, Gp, Op), jnp.float32)
    w_out2d = w_out2d.at[:, :num_genes, :num_output].set(w_dgo)
    w_out2d = w_out2d.reshape(gene_dim * Gp, Op)

    b_out = jnp.zeros((1, Op), jnp.float32).at[:, :num_output].set(p["b_out"])

    return dict(w_big=w_big,
                seg=seg.astype(jnp.bfloat16),
                b_sub=b_sub,
                ahT=ahT.astype(jnp.bfloat16),
                w_gcn=p["w_gcn"], b_gcn=p["b_gcn"],
                w_out2d=w_out2d.astype(jnp.bfloat16),
                b_out=b_out)


# ----------------------------------------------------------------------------
# Pure-JAX reference following the PyTorch forward step by step (all f32).
# ----------------------------------------------------------------------------
def reference_forward(x, params, peaks_per_gene):
    B = x.shape[0]
    num_genes = len(peaks_per_gene)
    gene_dim = params["w_gcn"].shape[0]
    hi = jax.lax.Precision.HIGHEST

    # per-gene subNet: slice, flatten (tf-major), Linear -> scalar
    cols = []
    off = 0
    for i, npk in enumerate(peaks_per_gene):
        x_sub = x[:, :, off:off + npk]                               # (B, T, P_i)
        w_sub = params["w_big"][:, off:off + npk]                    # (T, P_i)
        cols.append(jnp.sum(x_sub * w_sub[None], axis=(1, 2)) + params["b_sub"][0, i])
        off += npk
    x_cat = jnp.maximum(jnp.stack(cols, axis=1), 0.0)                # (B, G)

    # GCNConv(1, gene_dim): lin, normalized aggregation, bias, ReLU.
    x_lin = x_cat[:, :, None] * params["w_gcn"][None, None, :]       # (B, G, D)
    agg = jnp.einsum('gh,bhd->bgd', params["a_hat"], x_lin, precision=hi)
    h = jnp.maximum(agg + params["b_gcn"][None, None, :], 0.0)

    flat = h.reshape(B, num_genes * gene_dim)
    return jnp.dot(flat, params["w_out_full"].T, precision=hi) + params["b_out"]


if __name__ == "__main__":
    # Small synthetic configuration consistent with the module's forward.
    batch = 2
    num_tf = 8
    num_genes = 4
    peaks_per_gene = [3, 5, 4, 4]           # cut = [0, 3, 8, 12, 16]
    total_peaks = sum(peaks_per_gene)
    gene_dim = 2
    num_output = 3

    key = jax.random.PRNGKey(0)
    kx, kp_key = jax.random.split(key)
    x = jax.random.normal(kx, (batch, num_tf, total_peaks), jnp.float32)
    params = init_params(kp_key, num_genes, peaks_per_gene, num_tf,
                         gene_dim, num_output)
    kparams = pack_kernel_params(params, peaks_per_gene)

    out = net_gcn_forward(x, kparams, num_output)
    out = jax.block_until_ready(out)

    ref = reference_forward(x, params, peaks_per_gene)
    assert out.shape == (batch, num_output)
    # bf16 matmul operands with f32 accumulation -> compare loosely vs. f32 reference.
    assert jnp.allclose(out, ref, atol=2e-2, rtol=2e-2), (out, ref)

    print("KERNEL_OK")
</pallas_src>

<mosaic_0001>
module attributes {stable_mosaic.version = 11 : i64} {
  func.func @_net_gcn_kernel(%arg0: i32, %arg1: i32, %arg2: memref<8x8x128xf32, #tpu.memory_space<vmem>>, %arg3: memref<8x128xf32, #tpu.memory_space<vmem>>, %arg4: memref<128x128xbf16, #tpu.memory_space<vmem>>, %arg5: memref<1x128xf32, #tpu.memory_space<vmem>>, %arg6: memref<128x128xbf16, #tpu.memory_space<vmem>>, %arg7: memref<2xf32, #tpu.memory_space<smem>>, %arg8: memref<2xf32, #tpu.memory_space<smem>>, %arg9: memref<256x128xbf16, #tpu.memory_space<vmem>>, %arg10: memref<1x128xf32, #tpu.memory_space<vmem>>, %arg11: memref<8x128xf32, #tpu.memory_space<vmem>>, %arg12: memref<8x128xf32, #tpu.memory_space<vmem>>) attributes {dimension_semantics = [#tpu.dimension_semantics<parallel>, #tpu.dimension_semantics<arbitrary>], iteration_bounds = array<i64: 1, 1>, scalar_prefetch = 0 : i64, scratch_operands = 1 : i64, tpu.core_type = #tpu.core_type<tc>, window_params = [{transform_indices = @transform_0, window_bounds = array<i64: 8, 8, 128>}, {transform_indices = @transform_1, window_bounds = array<i64: 8, 128>}, {transform_indices = @transform_2, window_bounds = array<i64: 128, 128>}, {pipeline_mode = #tpu.pipeline_mode<synchronous>, transform_indices = @transform_3, window_bounds = array<i64: 1, 128>}, {pipeline_mode = #tpu.pipeline_mode<synchronous>, transform_indices = @transform_4, window_bounds = array<i64: 128, 128>}, {transform_indices = @transform_5, window_bounds = array<i64: 2>}, {transform_indices = @transform_6, window_bounds = array<i64: 2>}, {pipeline_mode = #tpu.pipeline_mode<synchronous>, transform_indices = @transform_7, window_bounds = array<i64: 256, 128>}, {pipeline_mode = #tpu.pipeline_mode<synchronous>, transform_indices = @transform_8, window_bounds = array<i64: 1, 128>}, {transform_indices = @transform_9, window_bounds = array<i64: 8, 128>}]} {
    %c0_i32 = arith.constant 0 : i32
    %0 = arith.cmpi eq, %arg1, %c0_i32 : i32
    %1 = arith.extui %0 : i1 to i32
    %c0_i32_0 = arith.constant 0 : i32
    %2 = arith.cmpi ne, %1, %c0_i32_0 : i32
    scf.if %2 {
      %cst_14 = arith.constant 0.000000e+00 : f32
      %18 = vector.broadcast %cst_14 : f32 to vector<8x128xf32>
      %c0_15 = arith.constant 0 : index
      %c0_16 = arith.constant 0 : index
      %19 = vector.load %arg12[%c0_15, %c0_16] : memref<8x128xf32, #tpu.memory_space<vmem>>, vector<8x128xf32>
      tpu.vector_store %arg12[%c0_15, %c0_16], %18 {strides = array<i32>} : memref<8x128xf32, #tpu.memory_space<vmem>>, vector<8x128xf32>,
    } else {
    }
    %c0 = arith.constant 0 : index
    %c0_1 = arith.constant 0 : index
    %c0_2 = arith.constant 0 : index
    %3 = vector.load %arg2[%c0, %c0_1, %c0_2] : memref<8x8x128xf32, #tpu.memory_space<vmem>>, vector<8x8x128xf32>
    %c0_3 = arith.constant 0 : index
    %c0_4 = arith.constant 0 : index
    %4 = vector.load %arg3[%c0_3, %c0_4] : memref<8x128xf32, #tpu.memory_space<vmem>>, vector<8x128xf32>
    %5 = vector.shape_cast %4 : vector<8x128xf32> to vector<1x8x128xf32>
    %6 = vector.broadcast %5 : vector<1x8x128xf32> to vector<8x8x128xf32>
    %7 = arith.mulf %3, %6 : vector<8x8x128xf32>
    %cst = arith.constant dense<0.000000e+00> : vector<8x128xf32>
    %8 = vector.multi_reduction <add>, %7, %cst [1] : vector<8x8x128xf32> to vector<8x128xf32>
    %c0_5 = arith.constant 0 : index
    %c0_6 = arith.constant 0 : index
    %9 = vector.load %arg12[%c0_5, %c0_6] : memref<8x128xf32, #tpu.memory_space<vmem>>, vector<8x128xf32>
    %10 = arith.truncf %8 : vector<8x128xf32> to vector<8x128xbf16>
    %c0_7 = arith.constant 0 : index
    %c0_8 = arith.constant 0 : index
    %11 = vector.load %arg4[%c0_7, %c0_8] : memref<128x128xbf16, #tpu.memory_space<vmem>>, vector<128x128xbf16>
    %cst_9 = arith.constant dense<0.000000e+00> : vector<8x128xf32>
    %12 = tpu.matmul %10, %11, %cst_9 {dimension_numbers = #tpu.dot_dimension_numbers<[1], [0], [0], [1], [0, 0, 1, 1], [], []>} : vector<8x128xbf16>, vector<128x128xbf16>, vector<8x128xf32> -> vector<8x128xf32>
    %13 = arith.addf %9, %12 : vector<8x128xf32>
    %c0_10 = arith.constant 0 : index
    %c0_11 = arith.constant 0 : index
    %14 = vector.load %arg12[%c0_10, %c0_11] : memref<8x128xf32, #tpu.memory_space<vmem>>, vector<8x128xf32>
    tpu.vector_store %arg12[%c0_10, %c0_11], %13 {strides = array<i32>} : memref<8x128xf32, #tpu.memory_space<vmem>>, vector<8x128xf32>,
    %c0_i32_12 = arith.constant 0 : i32
    %15 = arith.cmpi eq, %arg1, %c0_i32_12 : i32
    %16 = arith.extui %15 : i1 to i32
    %c0_i32_13 = arith.constant 0 : i32
    %17 = arith.cmpi ne, %16, %c0_i32_13 : i32
    scf.if %17 {
      %c0_14 = arith.constant 0 : index
      %c0_15 = arith.constant 0 : index
      %18 = vector.load %arg12[%c0_14, %c0_15] : memref<8x128xf32, #tpu.memory_space<vmem>>, vector<8x128xf32>
      %c0_16 = arith.constant 0 : index
      %c0_17 = arith.constant 0 : index
      %19 = vector.load %arg5[%c0_16, %c0_17] : memref<1x128xf32, #tpu.memory_space<vmem>>, vector<1x128xf32>
      %20 = vector.broadcast %19 : vector<1x128xf32> to vector<8x128xf32>
      %21 = arith.addf %18, %20 : vector<8x128xf32>
      %cst_18 = arith.constant 0.000000e+00 : f32
      %22 = vector.broadcast %cst_18 : f32 to vector<8x128xf32>
      %23 = arith.maximumf %21, %22 : vector<8x128xf32>
      %24 = arith.truncf %23 : vector<8x128xf32> to vector<8x128xbf16>
      %c0_19 = arith.constant 0 : index
      %c0_20 = arith.constant 0 : index
      %25 = vector.load %arg6[%c0_19, %c0_20] : memref<128x128xbf16, #tpu.memory_space<vmem>>, vector<128x128xbf16>
      %cst_21 = arith.constant dense<0.000000e+00> : vector<8x128xf32>
      %26 = tpu.matmul %24, %25, %cst_21 {dimension_numbers = #tpu.dot_dimension_numbers<[1], [0], [0], [1], [0, 0, 1, 1], [], []>} : vector<8x128xbf16>, vector<128x128xbf16>, vector<8x128xf32> -> vector<8x128xf32>
      %c0_22 = arith.constant 0 : index
      %c0_23 = arith.constant 0 : index
      %27 = vector.load %arg10[%c0_22, %c0_23] : memref<1x128xf32, #tpu.memory_space<vmem>>, vector<1x128xf32>
      %c0_24 = arith.constant 0 : index
      %28 = memref.load %arg7[%c0_24] : memref<2xf32, #tpu.memory_space<smem>>
      %29 = vector.broadcast %28 : f32 to vector<8x128xf32>
      %30 = arith.mulf %26, %29 : vector<8x128xf32>
      %c0_25 = arith.constant 0 : index
      %31 = memref.load %arg8[%c0_25] : memref<2xf32, #tpu.memory_space<smem>>
      %32 = vector.broadcast %31 : f32 to vector<8x128xf32>
      %33 = arith.addf %30, %32 : vector<8x128xf32>
      %cst_26 = arith.constant 0.000000e+00 : f32
      %34 = vector.broadcast %cst_26 : f32 to vector<8x128xf32>
      %35 = arith.maximumf %33, %34 : vector<8x128xf32>
      %36 = arith.truncf %35 : vector<8x128xf32> to vector<8x128xbf16>
      %c0_27 = arith.constant 0 : index
      %c0_28 = arith.constant 0 : index
      %37 = vector.load %arg9[%c0_27, %c0_28] : memref<256x128xbf16, #tpu.memory_space<vmem>>, vector<128x128xbf16>
      %cst_29 = arith.constant dense<0.000000e+00> : vector<8x128xf32>
      %38 = tpu.matmul %36, %37, %cst_29 {dimension_numbers = #tpu.dot_dimension_numbers<[1], [0], [0], [1], [0, 0, 1, 1], [], []>} : vector<8x128xbf16>, vector<128x128xbf16>, vector<8x128xf32> -> vector<8x128xf32>
      %39 = vector.broadcast %27 : vector<1x128xf32> to vector<8x128xf32>
      %40 = arith.addf %39, %38 : vector<8x128xf32>
      %c1 = arith.constant 1 : index
      %41 = memref.load %arg7[%c1] : memref<2xf32, #tpu.memory_space<smem>>
      %42 = vector.broadcast %41 : f32 to vector<8x128xf32>
      %43 = arith.mulf %26, %42 : vector<8x128xf32>
      %c1_30 = arith.constant 1 : index
      %44 = memref.load %arg8[%c1_30] : memref<2xf32, #tpu.memory_space<smem>>
      %45 = vector.broadcast %44 : f32 to vector<8x128xf32>
      %46 = arith.addf %43, %45 : vector<8x128xf32>
      %cst_31 = arith.constant 0.000000e+00 : f32
      %47 = vector.broadcast %cst_31 : f32 to vector<8x128xf32>
      %48 = arith.maximumf %46, %47 : vector<8x128xf32>
      %49 = arith.truncf %48 : vector<8x128xf32> to vector<8x128xbf16>
      %c128 = arith.constant 128 : index
      %c0_32 = arith.constant 0 : index
      %50 = vector.load %arg9[%c128, %c0_32] : memref<256x128xbf16, #tpu.memory_space<vmem>>, vector<128x128xbf16>
      %cst_33 = arith.constant dense<0.000000e+00> : vector<8x128xf32>
      %51 = tpu.matmul %49, %50, %cst_33 {dimension_numbers = #tpu.dot_dimension_numbers<[1], [0], [0], [1], [0, 0, 1, 1], [], []>} : vector<8x128xbf16>, vector<128x128xbf16>, vector<8x128xf32> -> vector<8x128xf32>
      %52 = arith.addf %40, %51 : vector<8x128xf32>
      %c0_34 = arith.constant 0 : index
      %c0_35 = arith.constant 0 : index
      %53 = vector.load %arg11[%c0_34, %c0_35] : memref<8x128xf32, #tpu.memory_space<vmem>>, vector<8x128xf32>
      tpu.vector_store %arg11[%c0_34, %c0_35], %52 {strides = array<i32>} : memref<8x128xf32, #tpu.memory_space<vmem>>, vector<8x128xf32>,
    } else {
    }
    return
  }
  func.func @transform_0(%arg0: i32, %arg1: i32) -> (i32, i32, i32) {
    %c0_i32 = arith.constant 0 : i32
    %c0_i32_0 = arith.constant 0 : i32
    return %arg0, %c0_i32, %arg1 : i32, i32, i32
  }
  func.func @transform_1(%arg0: i32, %arg1: i32) -> (i32, i32) {
    %c0_i32 = arith.constant 0 : i32
    %c0_i32_0 = arith.constant 0 : i32
    return %c0_i32, %arg1 : i32, i32
  }
  func.func @transform_2(%arg0: i32, %arg1: i32) -> (i32, i32) {
    %c0_i32 = arith.constant 0 : i32
    %c0_i32_0 = arith.constant 0 : i32
    return %arg1, %c0_i32 : i32, i32
  }
  func.func @transform_3(%arg0: i32, %arg1: i32) -> (i32, i32) {
    %c0_i32 = arith.constant 0 : i32
    %c0_i32_0 = arith.constant 0 : i32
    %c0_i32_1 = arith.constant 0 : i32
    return %c0_i32, %c0_i32_0 : i32, i32
  }
  func.func @transform_4(%arg0: i32, %arg1: i32) -> (i32, i32) {
    %c0_i32 = arith.constant 0 : i32
    %c0_i32_0 = arith.constant 0 : i32
    %c0_i32_1 = arith.constant 0 : i32
    return %c0_i32, %c0_i32_0 : i32, i32
  }
  func.func @transform_5(%arg0: i32, %arg1: i32) -> i32 {
    %c0_i32 = arith.constant 0 : i32
    %c0_i32_0 = arith.constant 0 : i32
    return %c0_i32 : i32
  }
  func.func @transform_6(%arg0: i32, %arg1: i32) -> i32 {
    %c0_i32 = arith.constant 0 : i32
    %c0_i32_0 = arith.constant 0 : i32
    return %c0_i32 : i32
  }
  func.func @transform_7(%arg0: i32, %arg1: i32) -> (i32, i32) {
    %c0_i32 = arith.constant 0 : i32
    %c0_i32_0 = arith.constant 0 : i32
    %c0_i32_1 = arith.constant 0 : i32
    return %c0_i32, %c0_i32_0 : i32, i32
  }
  func.func @transform_8(%arg0: i32, %arg1: i32) -> (i32, i32) {
    %c0_i32 = arith.constant 0 : i32
    %c0_i32_0 = arith.constant 0 : i32
    %c0_i32_1 = arith.constant 0 : i32
    return %c0_i32, %c0_i32_0 : i32, i32
  }
  func.func @transform_9(%arg0: i32, %arg1: i32) -> (i32, i32) {
    %c0_i32 = arith.constant 0 : i32
    %c0_i32_0 = arith.constant 0 : i32
    return %arg0, %c0_i32 : i32, i32
  }
}

module attributes {stable_mosaic.version = 11 : i64} {
  func.func @_net_gcn_kernel(%arg0: i32, %arg1: i32, %arg2: memref<8x8x128xf32, #tpu.memory_space<vmem>>, %arg3: memref<8x128xf32, #tpu.memory_space<vmem>>, %arg4: memref<128x128xbf16, #tpu.memory_space<vmem>>, %arg5: memref<1x128xf32, #tpu.memory_space<vmem>>, %arg6: memref<128x128xbf16, #tpu.memory_space<vmem>>, %arg7: memref<2xf32, #tpu.memory_space<smem>>, %arg8: memref<2xf32, #tpu.memory_space<smem>>, %arg9: memref<256x128xbf16, #tpu.memory_space<vmem>>, %arg10: memref<1x128xf32, #tpu.memory_space<vmem>>, %arg11: memref<8x128xf32, #tpu.memory_space<vmem>>, %arg12: memref<8x128xf32, #tpu.memory_space<vmem>>) attributes {dimension_semantics = [#tpu.dimension_semantics<parallel>, #tpu.dimension_semantics<arbitrary>], iteration_bounds = array<i64: 1, 1>, scalar_prefetch = 0 : i64, scratch_operands = 1 : i64, tpu.core_type = #tpu.core_type<tc>, window_params = [{transform_indices = @transform_0, window_bounds = array<i64: 8, 8, 128>}, {transform_indices = @transform_1, window_bounds = array<i64: 8, 128>}, {transform_indices = @transform_2, window_bounds = array<i64: 128, 128>}, {pipeline_mode = #tpu.pipeline_mode<synchronous>, transform_indices = @transform_3, window_bounds = array<i64: 1, 128>}, {pipeline_mode = #tpu.pipeline_mode<synchronous>, transform_indices = @transform_4, window_bounds = array<i64: 128, 128>}, {transform_indices = @transform_5, window_bounds = array<i64: 2>}, {transform_indices = @transform_6, window_bounds = array<i64: 2>}, {pipeline_mode = #tpu.pipeline_mode<synchronous>, transform_indices = @transform_7, window_bounds = array<i64: 256, 128>}, {pipeline_mode = #tpu.pipeline_mode<synchronous>, transform_indices = @transform_8, window_bounds = array<i64: 1, 128>}, {transform_indices = @transform_9, window_bounds = array<i64: 8, 128>}]} {
    %c0_i32 = arith.constant 0 : i32
    %0 = arith.cmpi eq, %arg1, %c0_i32 : i32
    %1 = arith.extui %0 : i1 to i32
    %c0_i32_0 = arith.constant 0 : i32
    %2 = arith.cmpi ne, %1, %c0_i32_0 : i32
    scf.if %2 {
      %cst_14 = arith.constant 0.000000e+00 : f32
      %18 = vector.broadcast %cst_14 : f32 to vector<8x128xf32>
      %c0_15 = arith.constant 0 : index
      %c0_16 = arith.constant 0 : index
      %19 = vector.load %arg12[%c0_15, %c0_16] : memref<8x128xf32, #tpu.memory_space<vmem>>, vector<8x128xf32>
      tpu.vector_store %arg12[%c0_15, %c0_16], %18 {strides = array<i32>} : memref<8x128xf32, #tpu.memory_space<vmem>>, vector<8x128xf32>,
    } else {
    }
    %c0 = arith.constant 0 : index
    %c0_1 = arith.constant 0 : index
    %c0_2 = arith.constant 0 : index
    %3 = vector.load %arg2[%c0, %c0_1, %c0_2] : memref<8x8x128xf32, #tpu.memory_space<vmem>>, vector<8x8x128xf32>
    %c0_3 = arith.constant 0 : index
    %c0_4 = arith.constant 0 : index
    %4 = vector.load %arg3[%c0_3, %c0_4] : memref<8x128xf32, #tpu.memory_space<vmem>>, vector<8x128xf32>
    %5 = vector.shape_cast %4 : vector<8x128xf32> to vector<1x8x128xf32>
    %6 = vector.broadcast %5 : vector<1x8x128xf32> to vector<8x8x128xf32>
    %7 = arith.mulf %3, %6 : vector<8x8x128xf32>
    %cst = arith.constant dense<0.000000e+00> : vector<8x128xf32>
    %8 = vector.multi_reduction <add>, %7, %cst [1] : vector<8x8x128xf32> to vector<8x128xf32>
    %c0_5 = arith.constant 0 : index
    %c0_6 = arith.constant 0 : index
    %9 = vector.load %arg12[%c0_5, %c0_6] : memref<8x128xf32, #tpu.memory_space<vmem>>, vector<8x128xf32>
    %10 = arith.truncf %8 : vector<8x128xf32> to vector<8x128xbf16>
    %c0_7 = arith.constant 0 : index
    %c0_8 = arith.constant 0 : index
    %11 = vector.load %arg4[%c0_7, %c0_8] : memref<128x128xbf16, #tpu.memory_space<vmem>>, vector<128x128xbf16>
    %cst_9 = arith.constant dense<0.000000e+00> : vector<8x128xf32>
    %12 = tpu.matmul %10, %11, %cst_9 {dimension_numbers = #tpu.dot_dimension_numbers<[1], [0], [0], [1], [0, 0, 1, 1], [], []>} : vector<8x128xbf16>, vector<128x128xbf16>, vector<8x128xf32> -> vector<8x128xf32>
    %13 = arith.addf %9, %12 : vector<8x128xf32>
    %c0_10 = arith.constant 0 : index
    %c0_11 = arith.constant 0 : index
    %14 = vector.load %arg12[%c0_10, %c0_11] : memref<8x128xf32, #tpu.memory_space<vmem>>, vector<8x128xf32>
    tpu.vector_store %arg12[%c0_10, %c0_11], %13 {strides = array<i32>} : memref<8x128xf32, #tpu.memory_space<vmem>>, vector<8x128xf32>,
    %c0_i32_12 = arith.constant 0 : i32
    %15 = arith.cmpi eq, %arg1, %c0_i32_12 : i32
    %16 = arith.extui %15 : i1 to i32
    %c0_i32_13 = arith.constant 0 : i32
    %17 = arith.cmpi ne, %16, %c0_i32_13 : i32
    scf.if %17 {
      %c0_14 = arith.constant 0 : index
      %c0_15 = arith.constant 0 : index
      %18 = vector.load %arg12[%c0_14, %c0_15] : memref<8x128xf32, #tpu.memory_space<vmem>>, vector<8x128xf32>
      %c0_16 = arith.constant 0 : index
      %c0_17 = arith.constant 0 : index
      %19 = vector.load %arg5[%c0_16, %c0_17] : memref<1x128xf32, #tpu.memory_space<vmem>>, vector<1x128xf32>
      %20 = vector.broadcast %19 : vector<1x128xf32> to vector<8x128xf32>
      %21 = arith.addf %18, %20 : vector<8x128xf32>
      %cst_18 = arith.constant 0.000000e+00 : f32
      %22 = vector.broadcast %cst_18 : f32 to vector<8x128xf32>
      %23 = arith.maximumf %21, %22 : vector<8x128xf32>
      %24 = arith.truncf %23 : vector<8x128xf32> to vector<8x128xbf16>
      %c0_19 = arith.constant 0 : index
      %c0_20 = arith.constant 0 : index
      %25 = vector.load %arg6[%c0_19, %c0_20] : memref<128x128xbf16, #tpu.memory_space<vmem>>, vector<128x128xbf16>
      %cst_21 = arith.constant dense<0.000000e+00> : vector<8x128xf32>
      %26 = tpu.matmul %24, %25, %cst_21 {dimension_numbers = #tpu.dot_dimension_numbers<[1], [0], [0], [1], [0, 0, 1, 1], [], []>} : vector<8x128xbf16>, vector<128x128xbf16>, vector<8x128xf32> -> vector<8x128xf32>
      %c0_22 = arith.constant 0 : index
      %c0_23 = arith.constant 0 : index
      %27 = vector.load %arg10[%c0_22, %c0_23] : memref<1x128xf32, #tpu.memory_space<vmem>>, vector<1x128xf32>
      %c0_24 = arith.constant 0 : index
      %28 = memref.load %arg7[%c0_24] : memref<2xf32, #tpu.memory_space<smem>>
      %29 = vector.broadcast %28 : f32 to vector<8x128xf32>
      %30 = arith.mulf %26, %29 : vector<8x128xf32>
      %c0_25 = arith.constant 0 : index
      %31 = memref.load %arg8[%c0_25] : memref<2xf32, #tpu.memory_space<smem>>
      %32 = vector.broadcast %31 : f32 to vector<8x128xf32>
      %33 = arith.addf %30, %32 : vector<8x128xf32>
      %cst_26 = arith.constant 0.000000e+00 : f32
      %34 = vector.broadcast %cst_26 : f32 to vector<8x128xf32>
      %35 = arith.maximumf %33, %34 : vector<8x128xf32>
      %36 = arith.truncf %35 : vector<8x128xf32> to vector<8x128xbf16>
      %c0_27 = arith.constant 0 : index
      %c0_28 = arith.constant 0 : index
      %37 = vector.load %arg9[%c0_27, %c0_28] : memref<256x128xbf16, #tpu.memory_space<vmem>>, vector<128x128xbf16>
      %cst_29 = arith.constant dense<0.000000e+00> : vector<8x128xf32>
      %38 = tpu.matmul %36, %37, %cst_29 {dimension_numbers = #tpu.dot_dimension_numbers<[1], [0], [0], [1], [0, 0, 1, 1], [], []>} : vector<8x128xbf16>, vector<128x128xbf16>, vector<8x128xf32> -> vector<8x128xf32>
      %39 = vector.broadcast %27 : vector<1x128xf32> to vector<8x128xf32>
      %40 = arith.addf %39, %38 : vector<8x128xf32>
      %c1 = arith.constant 1 : index
      %41 = memref.load %arg7[%c1] : memref<2xf32, #tpu.memory_space<smem>>
      %42 = vector.broadcast %41 : f32 to vector<8x128xf32>
      %43 = arith.mulf %26, %42 : vector<8x128xf32>
      %c1_30 = arith.constant 1 : index
      %44 = memref.load %arg8[%c1_30] : memref<2xf32, #tpu.memory_space<smem>>
      %45 = vector.broadcast %44 : f32 to vector<8x128xf32>
      %46 = arith.addf %43, %45 : vector<8x128xf32>
      %cst_31 = arith.constant 0.000000e+00 : f32
      %47 = vector.broadcast %cst_31 : f32 to vector<8x128xf32>
      %48 = arith.maximumf %46, %47 : vector<8x128xf32>
      %49 = arith.truncf %48 : vector<8x128xf32> to vector<8x128xbf16>
      %c128 = arith.constant 128 : index
      %c0_32 = arith.constant 0 : index
      %50 = vector.load %arg9[%c128, %c0_32] : memref<256x128xbf16, #tpu.memory_space<vmem>>, vector<128x128xbf16>
      %cst_33 = arith.constant dense<0.000000e+00> : vector<8x128xf32>
      %51 = tpu.matmul %49, %50, %cst_33 {dimension_numbers = #tpu.dot_dimension_numbers<[1], [0], [0], [1], [0, 0, 1, 1], [], []>} : vector<8x128xbf16>, vector<128x128xbf16>, vector<8x128xf32> -> vector<8x128xf32>
      %52 = arith.addf %40, %51 : vector<8x128xf32>
      %c0_34 = arith.constant 0 : index
      %c0_35 = arith.constant 0 : index
      %53 = vector.load %arg11[%c0_34, %c0_35] : memref<8x128xf32, #tpu.memory_space<vmem>>, vector<8x128xf32>
      tpu.vector_store %arg11[%c0_34, %c0_35], %52 {strides = array<i32>} : memref<8x128xf32, #tpu.memory_space<vmem>>, vector<8x128xf32>,
    } else {
    }
    return
  }
  func.func @transform_0(%arg0: i32, %arg1: i32) -> (i32, i32, i32) {
    %c0_i32 = arith.constant 0 : i32
    %c0_i32_0 = arith.constant 0 : i32
    return %arg0, %c0_i32, %arg1 : i32, i32, i32
  }
  func.func @transform_1(%arg0: i32, %arg1: i32) -> (i32, i32) {
    %c0_i32 = arith.constant 0 : i32
    %c0_i32_0 = arith.constant 0 : i32
    return %c0_i32, %arg1 : i32, i32
  }
  func.func @transform_2(%arg0: i32, %arg1: i32) -> (i32, i32) {
    %c0_i32 = arith.constant 0 : i32
    %c0_i32_0 = arith.constant 0 : i32
    return %arg1, %c0_i32 : i32, i32
  }
  func.func @transform_3(%arg0: i32, %arg1: i32) -> (i32, i32) {
    %c0_i32 = arith.constant 0 : i32
    %c0_i32_0 = arith.constant 0 : i32
    %c0_i32_1 = arith.constant 0 : i32
    return %c0_i32, %c0_i32_0 : i32, i32
  }
  func.func @transform_4(%arg0: i32, %arg1: i32) -> (i32, i32) {
    %c0_i32 = arith.constant 0 : i32
    %c0_i32_0 = arith.constant 0 : i32
    %c0_i32_1 = arith.constant 0 : i32
    return %c0_i32, %c0_i32_0 : i32, i32
  }
  func.func @transform_5(%arg0: i32, %arg1: i32) -> i32 {
    %c0_i32 = arith.constant 0 : i32
    %c0_i32_0 = arith.constant 0 : i32
    return %c0_i32 : i32
  }
  func.func @transform_6(%arg0: i32, %arg1: i32) -> i32 {
    %c0_i32 = arith.constant 0 : i32
    %c0_i32_0 = arith.constant 0 : i32
    return %c0_i32 : i32
  }
  func.func @transform_7(%arg0: i32, %arg1: i32) -> (i32, i32) {
    %c0_i32 = arith.constant 0 : i32
    %c0_i32_0 = arith.constant 0 : i32
    %c0_i32_1 = arith.constant 0 : i32
    return %c0_i32, %c0_i32_0 : i32, i32
  }
  func.func @transform_8(%arg0: i32, %arg1: i32) -> (i32, i32) {
    %c0_i32 = arith.constant 0 : i32
    %c0_i32_0 = arith.constant 0 : i32
    %c0_i32_1 = arith.constant 0 : i32
    return %c0_i32, %c0_i32_0 : i32, i32
  }
  func.func @transform_9(%arg0: i32, %arg1: i32) -> (i32, i32) {
    %c0_i32 = arith.constant 0 : i32
    %c0_i32_0 = arith.constant 0 : i32
    return %arg0, %c0_i32 : i32, i32
  }
}

</mosaic_0001>

<llo_original>
// kernel: tpu_custom_call.1
$region0: #{tpu_custom_call.1}
  #allocation0 [shape = 'u32[]', space=smem, size = 0x4, offset = 0x4, fixed_abs, tag = 'smem constant byte address 0x4 - core index']
  #allocation1 [shape = 'u32[72,128]{1,0:T(1,128)}', space=vmem, size = 0x9000, scoped, tag = 'internal scratch']
  #allocation2 [shape = 'f32[8,128]{1,0:T(8,128)}', space=vmem, size = 0x1000, scoped, tag = 'scratch operand']
  %s0 = inlined_call_operand.hbm [shape: f32[8,8,128], index: 0, kind: input, shape index: {}]
  %s1 = inlined_call_operand.hbm [shape: f32[8,128], index: 1, kind: input, shape index: {}]
  %s2 = inlined_call_operand.hbm [shape: bf16[128,128], index: 2, kind: input, shape index: {}]
  %s3 = inlined_call_operand.vmem [shape: f32[1,128], index: 3, kind: input, shape index: {}]
  %s4 = inlined_call_operand.hbm [shape: bf16[128,128], index: 4, kind: input, shape index: {}]
  %s5 = inlined_call_operand.vmem [shape: f32[2], index: 5, kind: input, shape index: {}]
  %s6 = inlined_call_operand.vmem [shape: f32[2], index: 6, kind: input, shape index: {}]
  %s7 = inlined_call_operand.hbm [shape: bf16[256,128], index: 7, kind: input, shape index: {}]
  %s8 = inlined_call_operand.vmem [shape: f32[1,128], index: 8, kind: input, shape index: {}]
  %s9 = inlined_call_operand.hbm [shape: f32[8,128], index: 9, kind: output, shape index: {}]
  %s10 = sld [smem:[#allocation0]]
  $region82: #{tpu_custom_call.1} parent=0
    _
  %s12 = ssub.s32 1, %s10
  %s13 = scalar_select 0, %s12, %s10
  $region1: #{tpu_custom_call.1} parent=0
    #allocation3 [shape = 'u8[32768]{0}', space=vmem, size = 0x8000, scoped, tag = 'input window, operand 0, single buffered']
    #allocation4 [shape = 's32[1]{0}', space=sflag, size = 0x4, scoped, tag = 'scoped memory for tpu_custom_call.1']
    #allocation5 [shape = 's32[1]{0}', space=sflag, size = 0x4, scoped, tag = 'scoped memory for tpu_custom_call.1']
    #allocation6 [shape = 's32[1]{0}', space=sflag, size = 0x4, scoped, tag = 'scoped memory for tpu_custom_call.1']
    #allocation7 [shape = 'u8[4096]{0}', space=vmem, size = 0x1000, scoped, tag = 'input window, operand 1, single buffered']
    #allocation8 [shape = 's32[1]{0}', space=sflag, size = 0x4, scoped, tag = 'scoped memory for tpu_custom_call.1']
    #allocation9 [shape = 'u8[32768]{0}', space=vmem, size = 0x8000, scoped, tag = 'input window, operand 2, single buffered']
    #allocation10 [shape = 'u8[32768]{0}', space=vmem, size = 0x8000, scoped, tag = 'input window, operand 4, single buffered']
    #allocation11 [shape = 's32[1]{0}', space=sflag, size = 0x4, scoped, tag = 'scoped memory for tpu_custom_call.1']
    #allocation12 [shape = 'u8[512]{0}', space=smem, size = 0x200, scoped, tag = 'input window, operand 5, single buffered']
    #allocation13 [shape = 'u8[512]{0}', space=smem, size = 0x200, scoped, tag = 'input window, operand 6, single buffered']
    #allocation14 [shape = 's32[1]{0}', space=sflag, size = 0x4, scoped, tag = 'scoped memory for tpu_custom_call.1']
    #allocation15 [shape = 'u8[65536]{0}', space=vmem, size = 0x10000, scoped, tag = 'input window, operand 7, single buffered']
    #allocation16 [shape = 'u8[4096]{0}', space=vmem, size = 0x1000, scoped, tag = 'output window, operand 0, single buffered']
    %14 = vsyncpa [#allocation4], 0
    %15 = vsyncpa [#allocation8], 0
    %16 = vsyncpa [#allocation11], 0
    %17 = vsyncpa [#allocation6], 0
    %18 = vsyncpa [#allocation14], 0
    %19 = vsyncpa [#allocation5], 0
    // Predicated region
    $region2: #{tpu_custom_call.1} parent=1 // pred_check
      _
    $region3: #{tpu_custom_call.1} parent=1 // pred_check_branch
      %21 = sbr.rel (0) target = $region5
    $region4: #{tpu_custom_call.1} parent=1 // pred_region
      %23 = vsyncadd [#allocation4], 0
      %s24 = sshll.u32 %s0, 4
      %s25 = int_to_ptr.hbm [resolvable:$true] %s24
      %s26 = sshll.u32 [#allocation3], 4
      %s27 = int_to_ptr.vmem [resolvable:$true] %s26
      %32 = dma.hbm_to_vmem [thread:$0]  %s25, 1024, %s27, [#allocation4], 128, 128, 8
    $region5: #{tpu_custom_call.1} parent=1 // pred_fallthru
      _
    // Predicated region
    $region6: #{tpu_custom_call.1} parent=1 // pred_check
      _
    $region7: #{tpu_custom_call.1} parent=1 // pred_check_branch
      %34 = sbr.rel (0) target = $region9
    $region8: #{tpu_custom_call.1} parent=1 // pred_region
      %36 = vsyncadd [#allocation8], 0
      %s38 = sshll.u32 %s1, 4
      %s39 = int_to_ptr.hbm [resolvable:$true] %s38
      %s40 = sshll.u32 [#allocation7], 4
      %s41 = int_to_ptr.vmem [resolvable:$true] %s40
      %43 = dma.hbm_to_vmem [thread:$0]  %s39, 128, %s41, [#allocation8]
    $region9: #{tpu_custom_call.1} parent=1 // pred_fallthru
      _
    // Predicated region
    $region10: #{tpu_custom_call.1} parent=1 // pred_check
      _
    $region11: #{tpu_custom_call.1} parent=1 // pred_check_branch
      %45 = sbr.rel (0) target = $region13
    $region12: #{tpu_custom_call.1} parent=1 // pred_region
      %47 = vsyncadd [#allocation8], 0
      %s48 = sshll.u32 %s2, 4
      %s49 = int_to_ptr.hbm [resolvable:$true] %s48
      %s50 = sshll.u32 [#allocation9], 4
      %s51 = int_to_ptr.vmem [resolvable:$true] %s50
      %56 = dma.hbm_to_vmem [thread:$0]  %s49, 1024, %s51, [#allocation8], 64, 64, 4
    $region13: #{tpu_custom_call.1} parent=1 // pred_fallthru
      _
    // Predicated region
    $region14: #{tpu_custom_call.1} parent=1 // pred_check
      _
    $region15: #{tpu_custom_call.1} parent=1 // pred_check_branch
      %58 = sbr.rel (0) target = $region17
    $region16: #{tpu_custom_call.1} parent=1 // pred_region
      _
    $region17: #{tpu_custom_call.1} parent=1 // pred_fallthru
      _
    // Predicated region
    $region18: #{tpu_custom_call.1} parent=1 // pred_check
      _
    $region19: #{tpu_custom_call.1} parent=1 // pred_check_branch
      %60 = sbr.rel (0) target = $region21
    $region20: #{tpu_custom_call.1} parent=1 // pred_region
      %62 = vsyncadd [#allocation11], 0
      %s63 = sshll.u32 %s4, 4
      %s64 = int_to_ptr.hbm [resolvable:$true] %s63
      %s65 = sshll.u32 [#allocation10], 4
      %s66 = int_to_ptr.vmem [resolvable:$true] %s65
      %71 = dma.hbm_to_vmem [thread:$0]  %s64, 1024, %s66, [#allocation11], 64, 64, 4
    $region21: #{tpu_custom_call.1} parent=1 // pred_fallthru
      _
    // Predicated region
    $region22: #{tpu_custom_call.1} parent=1 // pred_check
      _
    $region23: #{tpu_custom_call.1} parent=1 // pred_check_branch
      %73 = sbr.rel (0) target = $region25
    $region24: #{tpu_custom_call.1} parent=1 // pred_region
      %75 = vsyncadd [#allocation6], 0
      %s77 = sshll.u32 %s5, 4
      %s78 = int_to_ptr.vmem [resolvable:$true] %s77
      %80 = dma.vmem_to_smem %s78, 16, [#allocation12], [#allocation6]
    $region25: #{tpu_custom_call.1} parent=1 // pred_fallthru
      _
    // Predicated region
    $region26: #{tpu_custom_call.1} parent=1 // pred_check
      _
    $region27: #{tpu_custom_call.1} parent=1 // pred_check_branch
      %82 = sbr.rel (0) target = $region29
    $region28: #{tpu_custom_call.1} parent=1 // pred_region
      %84 = vsyncadd [#allocation14], 0
      %s86 = sshll.u32 %s6, 4
      %s87 = int_to_ptr.vmem [resolvable:$true] %s86
      %89 = dma.vmem_to_smem %s87, 16, [#allocation13], [#allocation14]
    $region29: #{tpu_custom_call.1} parent=1 // pred_fallthru
      _
    // Predicated region
    $region30: #{tpu_custom_call.1} parent=1 // pred_check
      _
    $region31: #{tpu_custom_call.1} parent=1 // pred_check_branch
      %91 = sbr.rel (0) target = $region33
    $region32: #{tpu_custom_call.1} parent=1 // pred_region
      %93 = vsyncadd [#allocation11], 0
      %s94 = sshll.u32 %s7, 4
      %s95 = int_to_ptr.hbm [resolvable:$true] %s94
      %s96 = sshll.u32 [#allocation15], 4
      %s97 = int_to_ptr.vmem [resolvable:$true] %s96
      %102 = dma.hbm_to_vmem [thread:$0]  %s95, 2048, %s97, [#allocation11], 64, 64, 4
    $region33: #{tpu_custom_call.1} parent=1 // pred_fallthru
      _
    // Predicated region
    $region34: #{tpu_custom_call.1} parent=1 // pred_check
      _
    $region35: #{tpu_custom_call.1} parent=1 // pred_check_branch
      %104 = sbr.rel (0) target = $region37
    $region36: #{tpu_custom_call.1} parent=1 // pred_region
      _
    $region37: #{tpu_custom_call.1} parent=1 // pred_fallthru
      _
    // Predicated region
    $region38: #{tpu_custom_call.1} parent=1 // pred_check
      _
    $region39: #{tpu_custom_call.1} parent=1 // pred_check_branch
      %106 = sbr.rel (0) target = $region41
    $region40: #{tpu_custom_call.1} parent=1 // pred_region
      %108 = dma.done [#allocation4], 1024
    $region41: #{tpu_custom_call.1} parent=1 // pred_fallthru
      _
    // Predicated region
    $region42: #{tpu_custom_call.1} parent=1 // pred_check
      _
    $region43: #{tpu_custom_call.1} parent=1 // pred_check_branch
      %110 = sbr.rel (0) target = $region45
    $region44: #{tpu_custom_call.1} parent=1 // pred_region
      %112 = dma.done [#allocation8], 128
    $region45: #{tpu_custom_call.1} parent=1 // pred_fallthru
      _
    // Predicated region
    $region46: #{tpu_custom_call.1} parent=1 // pred_check
      _
    $region47: #{tpu_custom_call.1} parent=1 // pred_check_branch
      %114 = sbr.rel (0) target = $region49
    $region48: #{tpu_custom_call.1} parent=1 // pred_region
      %116 = dma.done [#allocation8], 1024
    $region49: #{tpu_custom_call.1} parent=1 // pred_fallthru
      _
    // Predicated region
    $region50: #{tpu_custom_call.1} parent=1 // pred_check
      _
    $region51: #{tpu_custom_call.1} parent=1 // pred_check_branch
      %118 = sbr.rel (0) target = $region53
    $region52: #{tpu_custom_call.1} parent=1 // pred_region
      %120 = dma.done [#allocation11], 1024
    $region53: #{tpu_custom_call.1} parent=1 // pred_fallthru
      _
    // Predicated region
    $region54: #{tpu_custom_call.1} parent=1 // pred_check
      _
    $region55: #{tpu_custom_call.1} parent=1 // pred_check_branch
      %122 = sbr.rel (0) target = $region57
    $region56: #{tpu_custom_call.1} parent=1 // pred_region
      %124 = dma.done [#allocation6], 16
    $region57: #{tpu_custom_call.1} parent=1 // pred_fallthru
      _
    // Predicated region
    $region58: #{tpu_custom_call.1} parent=1 // pred_check
      _
    $region59: #{tpu_custom_call.1} parent=1 // pred_check_branch
      %126 = sbr.rel (0) target = $region61
    $region60: #{tpu_custom_call.1} parent=1 // pred_region
      %128 = dma.done [#allocation14], 16
    $region61: #{tpu_custom_call.1} parent=1 // pred_fallthru
      _
    // Predicated region
    $region62: #{tpu_custom_call.1} parent=1 // pred_check
      _
    $region63: #{tpu_custom_call.1} parent=1 // pred_check_branch
      %130 = sbr.rel (0) target = $region65
    $region64: #{tpu_custom_call.1} parent=1 // pred_region
      %132 = dma.done [#allocation11], 2048
    $region65: #{tpu_custom_call.1} parent=1 // pred_fallthru
      _
    %133 = sfence
    %p134 = scmp.eq.s32.totalorder 0, 0
    // Predicated region
    $region66: #{tpu_custom_call.1} parent=1 // pred_check
      %p135 = pneg %p134
    $region67: #{tpu_custom_call.1} parent=1 // pred_check_branch
      %137 = sbr.rel (%p135) target = $region69
    $region68: #{tpu_custom_call.1} parent=1 // pred_region
      %138 = vst [vmem:[#allocation2] sm:$0xff] 0.0
    $region69: #{tpu_custom_call.1} parent=1 // pred_fallthru
      _
    %v139 = vld [vmem:[#allocation3] sm:$0xff]
    %v140 = vld [vmem:[#allocation3 + $0x8] sm:$0xff]
    %v141 = vld [vmem:[#allocation3 + $0x10] sm:$0xff]
    %v142 = vld [vmem:[#allocation3 + $0x18] sm:$0xff]
    %v143 = vld [vmem:[#allocation3 + $0x20] sm:$0xff]
    %v144 = vld [vmem:[#allocation3 + $0x28] sm:$0xff]
    %v145 = vld [vmem:[#allocation3 + $0x30] sm:$0xff]
    %v146 = vld [vmem:[#allocation3 + $0x38] sm:$0xff]
    %v147 = vld [vmem:[#allocation7] sm:$0xff]
    %v148 = vmul.f32 %v139, %v147
    %v149 = vmul.f32 %v140, %v147
    %v150 = vmul.f32 %v141, %v147
    %v151 = vmul.f32 %v142, %v147
    %v152 = vmul.f32 %v143, %v147
    %v153 = vmul.f32 %v144, %v147
    %v154 = vmul.f32 %v145, %v147
    %v155 = vmul.f32 %v146, %v147
    %v156 = vrot.slane %v148, 4
    %v157 = vadd.f32 %v148, %v156
    %v158 = vrot.slane %v157, 2
    %v159 = vadd.f32 %v157, %v158
    %v160 = vrot.slane %v159, 1
    %v161 = vadd.f32 %v159, %v160
    %v162 = vrot.slane %v149, 4
    %v163 = vadd.f32 %v149, %v162
    %v164 = vrot.slane %v163, 2
    %v165 = vadd.f32 %v163, %v164
    %v166 = vrot.slane %v165, 1
    %v167 = vadd.f32 %v165, %v166
    %v168 = vrot.slane %v150, 4
    %v169 = vadd.f32 %v150, %v168
    %v170 = vrot.slane %v169, 2
    %v171 = vadd.f32 %v169, %v170
    %v172 = vrot.slane %v171, 1
    %v173 = vadd.f32 %v171, %v172
    %v174 = vrot.slane %v151, 4
    %v175 = vadd.f32 %v151, %v174
    %v176 = vrot.slane %v175, 2
    %v177 = vadd.f32 %v175, %v176
    %v178 = vrot.slane %v177, 1
    %v179 = vadd.f32 %v177, %v178
    %v180 = vrot.slane %v152, 4
    %v181 = vadd.f32 %v152, %v180
    %v182 = vrot.slane %v181, 2
    %v183 = vadd.f32 %v181, %v182
    %v184 = vrot.slane %v183, 1
    %v185 = vadd.f32 %v183, %v184
    %v186 = vrot.slane %v153, 4
    %v187 = vadd.f32 %v153, %v186
    %v188 = vrot.slane %v187, 2
    %v189 = vadd.f32 %v187, %v188
    %v190 = vrot.slane %v189, 1
    %v191 = vadd.f32 %v189, %v190
    %v192 = vrot.slane %v154, 4
    %v193 = vadd.f32 %v154, %v192
    %v194 = vrot.slane %v193, 2
    %v195 = vadd.f32 %v193, %v194
    %v196 = vrot.slane %v195, 1
    %v197 = vadd.f32 %v195, %v196
    %v198 = vrot.slane %v155, 4
    %v199 = vadd.f32 %v155, %v198
    %v200 = vrot.slane %v199, 2
    %v201 = vadd.f32 %v199, %v200
    %v202 = vrot.slane %v201, 1
    %v203 = vadd.f32 %v201, %v202
    %v204 = vld [vmem:[#allocation2] sm:$0xff]
    %v205 = vpack.c.bf16 %v161, %v161
    %v206 = vpack.c.bf16 %v167, %v167
    %v207 = vpack.c.bf16 %v173, %v173
    %v208 = vpack.c.bf16 %v179, %v179
    %v209 = vpack.c.bf16 %v185, %v185
    %v210 = vpack.c.bf16 %v191, %v191
    %v211 = vpack.c.bf16 %v197, %v197
    %v212 = vpack.c.bf16 %v203, %v203
    %v213 = vld [vmem:[#allocation9] sm:$0xf]
    %v214 = vld [vmem:[#allocation9 + $0x4] sm:$0xf]
    %v215 = vld [vmem:[#allocation9 + $0x8] sm:$0xf]
    %v216 = vld [vmem:[#allocation9 + $0xc] sm:$0xf]
    %v217 = vld [vmem:[#allocation9 + $0x10] sm:$0xf]
    %v218 = vld [vmem:[#allocation9 + $0x14] sm:$0xf]
    %v219 = vld [vmem:[#allocation9 + $0x18] sm:$0xf]
    %v220 = vld [vmem:[#allocation9 + $0x1c] sm:$0xf]
    %v221 = vld [vmem:[#allocation9 + $0x20] sm:$0xf]
    %v222 = vld [vmem:[#allocation9 + $0x24] sm:$0xf]
    %v223 = vld [vmem:[#allocation9 + $0x28] sm:$0xf]
    %v224 = vld [vmem:[#allocation9 + $0x2c] sm:$0xf]
    %v225 = vld [vmem:[#allocation9 + $0x30] sm:$0xf]
    %v226 = vld [vmem:[#allocation9 + $0x34] sm:$0xf]
    %v227 = vld [vmem:[#allocation9 + $0x38] sm:$0xf]
    %v228 = vld [vmem:[#allocation9 + $0x3c] sm:$0xf]
    %v237 = vunpack.c.l.b16 %v205
    %v238 = vunpack.c.l.b16 %v206
    %v239 = vunpack.c.l.b16 %v207
    %v240 = vunpack.c.l.b16 %v208
    %v241 = vunpack.c.l.b16 %v209
    %v242 = vunpack.c.l.b16 %v210
    %v243 = vunpack.c.l.b16 %v211
    %v244 = vunpack.c.l.b16 %v212
    %vm245 = vcmask 1041409
    %v246 = vsel %vm245, %v238, %v237
    %vm247 = vcmask 1042434
    %v248 = vsel %vm247, %v239, %v246
    %vm249 = vcmask 1043459
    %v250 = vsel %vm249, %v240, %v248
    %vm251 = vcmask 1044484
    %v252 = vsel %vm251, %v241, %v250
    %vm253 = vcmask 1045509
    %v254 = vsel %vm253, %v242, %v252
    %vm255 = vcmask 1046534
    %v256 = vsel %vm255, %v243, %v254
    %vm257 = vcmask 1047559
    %v258 = vsel %vm257, %v244, %v256
    %v259 = vpack.c.b16 %v258, %v258
    %v277 = vunpack.c.l.b16 %v213
    %v278 = vunpack.c.l.b16 %v214
    %v279 = vunpack.c.l.b16 %v215
    %v280 = vunpack.c.l.b16 %v216
    %v281 = vunpack.c.l.b16 %v217
    %v282 = vunpack.c.l.b16 %v218
    %v283 = vunpack.c.l.b16 %v219
    %v284 = vunpack.c.l.b16 %v220
    %v285 = vunpack.c.l.b16 %v221
    %v286 = vunpack.c.l.b16 %v222
    %v287 = vunpack.c.l.b16 %v223
    %v288 = vunpack.c.l.b16 %v224
    %v289 = vunpack.c.l.b16 %v225
    %v290 = vunpack.c.l.b16 %v226
    %v291 = vunpack.c.l.b16 %v227
    %v292 = vunpack.c.l.b16 %v228
    %v293 = vpack.c.b16 %v278, %v277
    %v294 = vpack.c.b16 %v280, %v279
    %v295 = vpack.c.b16 %v282, %v281
    %v296 = vpack.c.b16 %v284, %v283
    %v297 = vpack.c.b16 %v286, %v285
    %v298 = vpack.c.b16 %v288, %v287
    %v299 = vpack.c.b16 %v290, %v289
    %v300 = vpack.c.b16 %v292, %v291
    %309 = vmatpush.bf16.msra.mxu0 %v300
    %310 = vmatpush.bf16.msra.mxu0 %v299
    %311 = vmatpush.bf16.msra.mxu0 %v298
    %312 = vmatpush.bf16.msra.mxu0 %v297
    %313 = vmatpush.bf16.msra.mxu0 %v296
    %314 = vmatpush.bf16.msra.mxu0 %v295
    %315 = vmatpush.bf16.msra.mxu0 %v294
    %316 = vmatpush.bf16.msra.mxu0 %v293
    %317 = vmatmul.bf16.gmra.mxu0 %v259
    %v318 = vpop.f32.mrf.mxu0
    %v319 = vadd.f32 0.0, %v318
    %v320 = vpop.f32.mrf.mxu0
    %321 = vdwg.mxu0
    %v322 = vadd.f32 %v204, %v319
    %323 = vst [vmem:[#allocation2] sm:$0xff] %v322
    // Predicated region
    $region70: #{tpu_custom_call.1} parent=1 // pred_check
      %p324 = pneg %p134
    $region71: #{tpu_custom_call.1} parent=1 // pred_check_branch
      %326 = sbr.rel (%p324) target = $region73
    $region72: #{tpu_custom_call.1} parent=1 // pred_region
      %v327 = vld [vmem:[#allocation2] sm:$0xff]
      %v328 = vld [vmem:[%s3] sm:$0x1]
      %v330 = vperm.slane %v328, 0
      %v332 = vadd.f32 %v327, %v330
      %v333 = vmax.f32 %v332, 0.0
      %v334 = vpack.c.bf16 %v333, %v333
      %v335 = vld [vmem:[#allocation10] sm:$0xf]
      %v336 = vld [vmem:[#allocation10 + $0x4] sm:$0xf]
      %v337 = vld [vmem:[#allocation10 + $0x8] sm:$0xf]
      %v338 = vld [vmem:[#allocation10 + $0xc] sm:$0xf]
      %v339 = vld [vmem:[#allocation10 + $0x10] sm:$0xf]
      %v340 = vld [vmem:[#allocation10 + $0x14] sm:$0xf]
      %v341 = vld [vmem:[#allocation10 + $0x18] sm:$0xf]
      %v342 = vld [vmem:[#allocation10 + $0x1c] sm:$0xf]
      %v343 = vld [vmem:[#allocation10 + $0x20] sm:$0xf]
      %v344 = vld [vmem:[#allocation10 + $0x24] sm:$0xf]
      %v345 = vld [vmem:[#allocation10 + $0x28] sm:$0xf]
      %v346 = vld [vmem:[#allocation10 + $0x2c] sm:$0xf]
      %v347 = vld [vmem:[#allocation10 + $0x30] sm:$0xf]
      %v348 = vld [vmem:[#allocation10 + $0x34] sm:$0xf]
      %v349 = vld [vmem:[#allocation10 + $0x38] sm:$0xf]
      %v350 = vld [vmem:[#allocation10 + $0x3c] sm:$0xf]
      %v367 = vunpack.c.l.b16 %v335
      %v368 = vunpack.c.l.b16 %v336
      %v369 = vunpack.c.l.b16 %v337
      %v370 = vunpack.c.l.b16 %v338
      %v371 = vunpack.c.l.b16 %v339
      %v372 = vunpack.c.l.b16 %v340
      %v373 = vunpack.c.l.b16 %v341
      %v374 = vunpack.c.l.b16 %v342
      %v375 = vunpack.c.l.b16 %v343
      %v376 = vunpack.c.l.b16 %v344
      %v377 = vunpack.c.l.b16 %v345
      %v378 = vunpack.c.l.b16 %v346
      %v379 = vunpack.c.l.b16 %v347
      %v380 = vunpack.c.l.b16 %v348
      %v381 = vunpack.c.l.b16 %v349
      %v382 = vunpack.c.l.b16 %v350
      %v383 = vpack.c.b16 %v368, %v367
      %v384 = vpack.c.b16 %v370, %v369
      %v385 = vpack.c.b16 %v372, %v371
      %v386 = vpack.c.b16 %v374, %v373
      %v387 = vpack.c.b16 %v376, %v375
      %v388 = vpack.c.b16 %v378, %v377
      %v389 = vpack.c.b16 %v380, %v379
      %v390 = vpack.c.b16 %v382, %v381
      %399 = vmatpush.bf16.msra.mxu0 %v390
      %400 = vmatpush.bf16.msra.mxu0 %v389
      %401 = vmatpush.bf16.msra.mxu0 %v388
      %402 = vmatpush.bf16.msra.mxu0 %v387
      %403 = vmatpush.bf16.msra.mxu0 %v386
      %404 = vmatpush.bf16.msra.mxu0 %v385
      %405 = vmatpush.bf16.msra.mxu0 %v384
      %406 = vmatpush.bf16.msra.mxu0 %v383
      %407 = vmatmul.bf16.gmra.mxu0 %v334
      %v408 = vpop.f32.mrf.mxu0
      %v409 = vadd.f32 0.0, %v408
      %v410 = vpop.f32.mrf.mxu0
      %411 = vdwg.mxu0
      %v412 = vld [vmem:[%s8] sm:$0x1]
      %s413 = sld [smem:[#allocation12]]
      %v414 = vstv %s413
      %v415 = vmul.f32 %v409, %v414
      %s416 = sld [smem:[#allocation13]]
      %v417 = vstv %s416
      %v418 = vadd.f32 %v415, %v417
      %v419 = vmax.f32 %v418, 0.0
      %v420 = vpack.c.bf16 %v419, %v419
      %v421 = vld [vmem:[#allocation15] sm:$0xf]
      %v422 = vld [vmem:[#allocation15 + $0x4] sm:$0xf]
      %v423 = vld [vmem:[#allocation15 + $0x8] sm:$0xf]
      %v424 = vld [vmem:[#allocation15 + $0xc] sm:$0xf]
      %v425 = vld [vmem:[#allocation15 + $0x10] sm:$0xf]
      %v426 = vld [vmem:[#allocation15 + $0x14] sm:$0xf]
      %v427 = vld [vmem:[#allocation15 + $0x18] sm:$0xf]
      %v428 = vld [vmem:[#allocation15 + $0x1c] sm:$0xf]
      %v429 = vld [vmem:[#allocation15 + $0x20] sm:$0xf]
      %v430 = vld [vmem:[#allocation15 + $0x24] sm:$0xf]
      %v431 = vld [vmem:[#allocation15 + $0x28] sm:$0xf]
      %v432 = vld [vmem:[#allocation15 + $0x2c] sm:$0xf]
      %v433 = vld [vmem:[#allocation15 + $0x30] sm:$0xf]
      %v434 = vld [vmem:[#allocation15 + $0x34] sm:$0xf]
      %v435 = vld [vmem:[#allocation15 + $0x38] sm:$0xf]
      %v436 = vld [vmem:[#allocation15 + $0x3c] sm:$0xf]
      %v453 = vunpack.c.l.b16 %v421
      %v454 = vunpack.c.l.b16 %v422
      %v455 = vunpack.c.l.b16 %v423
      %v456 = vunpack.c.l.b16 %v424
      %v457 = vunpack.c.l.b16 %v425
      %v458 = vunpack.c.l.b16 %v426
      %v459 = vunpack.c.l.b16 %v427
      %v460 = vunpack.c.l.b16 %v428
      %v461 = vunpack.c.l.b16 %v429
      %v462 = vunpack.c.l.b16 %v430
      %v463 = vunpack.c.l.b16 %v431
      %v464 = vunpack.c.l.b16 %v432
      %v465 = vunpack.c.l.b16 %v433
      %v466 = vunpack.c.l.b16 %v434
      %v467 = vunpack.c.l.b16 %v435
      %v468 = vunpack.c.l.b16 %v436
      %v469 = vpack.c.b16 %v454, %v453
      %v470 = vpack.c.b16 %v456, %v455
      %v471 = vpack.c.b16 %v458, %v457
      %v472 = vpack.c.b16 %v460, %v459
      %v473 = vpack.c.b16 %v462, %v461
      %v474 = vpack.c.b16 %v464, %v463
      %v475 = vpack.c.b16 %v466, %v465
      %v476 = vpack.c.b16 %v468, %v467
      %485 = vmatpush.bf16.msra.mxu0 %v476
      %486 = vmatpush.bf16.msra.mxu0 %v475
      %487 = vmatpush.bf16.msra.mxu0 %v474
      %488 = vmatpush.bf16.msra.mxu0 %v473
      %489 = vmatpush.bf16.msra.mxu0 %v472
      %490 = vmatpush.bf16.msra.mxu0 %v471
      %491 = vmatpush.bf16.msra.mxu0 %v470
      %492 = vmatpush.bf16.msra.mxu0 %v469
      %493 = vmatmul.bf16.gmra.mxu0 %v420
      %v494 = vpop.f32.mrf.mxu0
      %v495 = vadd.f32 0.0, %v494
      %v496 = vpop.f32.mrf.mxu0
      %497 = vdwg.mxu0
      %v499 = vperm.slane %v412, 0
      %v501 = vadd.f32 %v499, %v495
      %s502 = sld [smem:[#allocation12 + $0x1]]
      %v503 = vstv %s502
      %v504 = vmul.f32 %v409, %v503
      %s505 = sld [smem:[#allocation13 + $0x1]]
      %v506 = vstv %s505
      %v507 = vadd.f32 %v504, %v506
      %v508 = vmax.f32 %v507, 0.0
      %v509 = vpack.c.bf16 %v508, %v508
      %v510 = vld [vmem:[#allocation15 + $0x40] sm:$0xf]
      %v511 = vld [vmem:[#allocation15 + $0x44] sm:$0xf]
      %v512 = vld [vmem:[#allocation15 + $0x48] sm:$0xf]
      %v513 = vld [vmem:[#allocation15 + $0x4c] sm:$0xf]
      %v514 = vld [vmem:[#allocation15 + $0x50] sm:$0xf]
      %v515 = vld [vmem:[#allocation15 + $0x54] sm:$0xf]
      %v516 = vld [vmem:[#allocation15 + $0x58] sm:$0xf]
      %v517 = vld [vmem:[#allocation15 + $0x5c] sm:$0xf]
      %v518 = vld [vmem:[#allocation15 + $0x60] sm:$0xf]
      %v519 = vld [vmem:[#allocation15 + $0x64] sm:$0xf]
      %v520 = vld [vmem:[#allocation15 + $0x68] sm:$0xf]
      %v521 = vld [vmem:[#allocation15 + $0x6c] sm:$0xf]
      %v522 = vld [vmem:[#allocation15 + $0x70] sm:$0xf]
      %v523 = vld [vmem:[#allocation15 + $0x74] sm:$0xf]
      %v524 = vld [vmem:[#allocation15 + $0x78] sm:$0xf]
      %v525 = vld [vmem:[#allocation15 + $0x7c] sm:$0xf]
      %v542 = vunpack.c.l.b16 %v510
      %v543 = vunpack.c.l.b16 %v511
      %v544 = vunpack.c.l.b16 %v512
      %v545 = vunpack.c.l.b16 %v513
      %v546 = vunpack.c.l.b16 %v514
      %v547 = vunpack.c.l.b16 %v515
      %v548 = vunpack.c.l.b16 %v516
      %v549 = vunpack.c.l.b16 %v517
      %v550 = vunpack.c.l.b16 %v518
      %v551 = vunpack.c.l.b16 %v519
      %v552 = vunpack.c.l.b16 %v520
      %v553 = vunpack.c.l.b16 %v521
      %v554 = vunpack.c.l.b16 %v522
      %v555 = vunpack.c.l.b16 %v523
      %v556 = vunpack.c.l.b16 %v524
      %v557 = vunpack.c.l.b16 %v525
      %v558 = vpack.c.b16 %v543, %v542
      %v559 = vpack.c.b16 %v545, %v544
      %v560 = vpack.c.b16 %v547, %v546
      %v561 = vpack.c.b16 %v549, %v548
      %v562 = vpack.c.b16 %v551, %v550
      %v563 = vpack.c.b16 %v553, %v552
      %v564 = vpack.c.b16 %v555, %v554
      %v565 = vpack.c.b16 %v557, %v556
      %574 = vmatpush.bf16.msra.mxu0 %v565
      %575 = vmatpush.bf16.msra.mxu0 %v564
      %576 = vmatpush.bf16.msra.mxu0 %v563
      %577 = vmatpush.bf16.msra.mxu0 %v562
      %578 = vmatpush.bf16.msra.mxu0 %v561
      %579 = vmatpush.bf16.msra.mxu0 %v560
      %580 = vmatpush.bf16.msra.mxu0 %v559
      %581 = vmatpush.bf16.msra.mxu0 %v558
      %582 = vmatmul.bf16.gmra.mxu0 %v509
      %v583 = vpop.f32.mrf.mxu0
      %v584 = vadd.f32 0.0, %v583
      %v585 = vpop.f32.mrf.mxu0
      %586 = vdwg.mxu0
      %v587 = vadd.f32 %v501, %v584
      %588 = vst [vmem:[#allocation16] sm:$0xff] %v587
    $region73: #{tpu_custom_call.1} parent=1 // pred_fallthru
      _
    // Predicated region
    $region74: #{tpu_custom_call.1} parent=1 // pred_check
      _
    $region75: #{tpu_custom_call.1} parent=1 // pred_check_branch
      %590 = sbr.rel (0) target = $region77
    $region76: #{tpu_custom_call.1} parent=1 // pred_region
      %592 = vsyncadd [#allocation5], 0
      %s594 = sshll.u32 [#allocation16], 4
      %s595 = int_to_ptr.vmem [resolvable:$true] %s594
      %s596 = sshll.u32 %s9, 4
      %s597 = int_to_ptr.hbm [resolvable:$true] %s596
      %599 = dma.vmem_to_hbm [thread:$0]  %s595, 128, %s597, [#allocation5]
    $region77: #{tpu_custom_call.1} parent=1 // pred_fallthru
      _
    // Predicated region
    $region78: #{tpu_custom_call.1} parent=1 // pred_check
      _
    $region79: #{tpu_custom_call.1} parent=1 // pred_check_branch
      %601 = sbr.rel (0) target = $region81
    $region80: #{tpu_custom_call.1} parent=1 // pred_region
      %603 = dma.done [#allocation5], 128
    $region81: #{tpu_custom_call.1} parent=1 // pred_fallthru
      _
    %604 = vsyncpa [#allocation4], 1
    %605 = vsyncpa [#allocation8], 1
    %606 = vsyncpa [#allocation11], 1
    %607 = vsyncpa [#allocation5], 1
    %608 = vsyncpa [#allocation6], 1
    %609 = vsyncpa [#allocation14], 1

// kernel: tpu_custom_call.1
$region0: #{tpu_custom_call.1}
  #allocation0 [shape = 'u32[]', space=smem, size = 0x4, offset = 0x4, fixed_abs, tag = 'smem constant byte address 0x4 - core index']
  #allocation1 [shape = 'u32[72,128]{1,0:T(1,128)}', space=vmem, size = 0x9000, scoped, tag = 'internal scratch']
  #allocation2 [shape = 'f32[8,128]{1,0:T(8,128)}', space=vmem, size = 0x1000, scoped, tag = 'scratch operand']
  %s0 = inlined_call_operand.hbm [shape: f32[8,8,128], index: 0, kind: input, shape index: {}]
  %s1 = inlined_call_operand.hbm [shape: f32[8,128], index: 1, kind: input, shape index: {}]
  %s2 = inlined_call_operand.hbm [shape: bf16[128,128], index: 2, kind: input, shape index: {}]
  %s3 = inlined_call_operand.vmem [shape: f32[1,128], index: 3, kind: input, shape index: {}]
  %s4 = inlined_call_operand.hbm [shape: bf16[128,128], index: 4, kind: input, shape index: {}]
  %s5 = inlined_call_operand.vmem [shape: f32[2], index: 5, kind: input, shape index: {}]
  %s6 = inlined_call_operand.vmem [shape: f32[2], index: 6, kind: input, shape index: {}]
  %s7 = inlined_call_operand.hbm [shape: bf16[256,128], index: 7, kind: input, shape index: {}]
  %s8 = inlined_call_operand.vmem [shape: f32[1,128], index: 8, kind: input, shape index: {}]
  %s9 = inlined_call_operand.hbm [shape: f32[8,128], index: 9, kind: output, shape index: {}]
  %s10 = sld [smem:[#allocation0]]
  $region82: #{tpu_custom_call.1} parent=0
    _
  %s12 = ssub.s32 1, %s10
  %s13 = scalar_select 0, %s12, %s10
  $region1: #{tpu_custom_call.1} parent=0
    #allocation3 [shape = 'u8[32768]{0}', space=vmem, size = 0x8000, scoped, tag = 'input window, operand 0, single buffered']
    #allocation4 [shape = 's32[1]{0}', space=sflag, size = 0x4, scoped, tag = 'scoped memory for tpu_custom_call.1']
    #allocation5 [shape = 's32[1]{0}', space=sflag, size = 0x4, scoped, tag = 'scoped memory for tpu_custom_call.1']
    #allocation6 [shape = 's32[1]{0}', space=sflag, size = 0x4, scoped, tag = 'scoped memory for tpu_custom_call.1']
    #allocation7 [shape = 'u8[4096]{0}', space=vmem, size = 0x1000, scoped, tag = 'input window, operand 1, single buffered']
    #allocation8 [shape = 's32[1]{0}', space=sflag, size = 0x4, scoped, tag = 'scoped memory for tpu_custom_call.1']
    #allocation9 [shape = 'u8[32768]{0}', space=vmem, size = 0x8000, scoped, tag = 'input window, operand 2, single buffered']
    #allocation10 [shape = 'u8[32768]{0}', space=vmem, size = 0x8000, scoped, tag = 'input window, operand 4, single buffered']
    #allocation11 [shape = 's32[1]{0}', space=sflag, size = 0x4, scoped, tag = 'scoped memory for tpu_custom_call.1']
    #allocation12 [shape = 'u8[512]{0}', space=smem, size = 0x200, scoped, tag = 'input window, operand 5, single buffered']
    #allocation13 [shape = 'u8[512]{0}', space=smem, size = 0x200, scoped, tag = 'input window, operand 6, single buffered']
    #allocation14 [shape = 's32[1]{0}', space=sflag, size = 0x4, scoped, tag = 'scoped memory for tpu_custom_call.1']
    #allocation15 [shape = 'u8[65536]{0}', space=vmem, size = 0x10000, scoped, tag = 'input window, operand 7, single buffered']
    #allocation16 [shape = 'u8[4096]{0}', space=vmem, size = 0x1000, scoped, tag = 'output window, operand 0, single buffered']
    %14 = vsyncpa [#allocation4], 0
    %15 = vsyncpa [#allocation8], 0
    %16 = vsyncpa [#allocation11], 0
    %17 = vsyncpa [#allocation6], 0
    %18 = vsyncpa [#allocation14], 0
    %19 = vsyncpa [#allocation5], 0
    // Predicated region
    $region2: #{tpu_custom_call.1} parent=1 // pred_check
      _
    $region3: #{tpu_custom_call.1} parent=1 // pred_check_branch
      %21 = sbr.rel (0) target = $region5
    $region4: #{tpu_custom_call.1} parent=1 // pred_region
      %23 = vsyncadd [#allocation4], 0
      %s24 = sshll.u32 %s0, 4
      %s25 = int_to_ptr.hbm [resolvable:$true] %s24
      %s26 = sshll.u32 [#allocation3], 4
      %s27 = int_to_ptr.vmem [resolvable:$true] %s26
      %32 = dma.hbm_to_vmem [thread:$0]  %s25, 1024, %s27, [#allocation4], 128, 128, 8
    $region5: #{tpu_custom_call.1} parent=1 // pred_fallthru
      _
    // Predicated region
    $region6: #{tpu_custom_call.1} parent=1 // pred_check
      _
    $region7: #{tpu_custom_call.1} parent=1 // pred_check_branch
      %34 = sbr.rel (0) target = $region9
    $region8: #{tpu_custom_call.1} parent=1 // pred_region
      %36 = vsyncadd [#allocation8], 0
      %s38 = sshll.u32 %s1, 4
      %s39 = int_to_ptr.hbm [resolvable:$true] %s38
      %s40 = sshll.u32 [#allocation7], 4
      %s41 = int_to_ptr.vmem [resolvable:$true] %s40
      %43 = dma.hbm_to_vmem [thread:$0]  %s39, 128, %s41, [#allocation8]
    $region9: #{tpu_custom_call.1} parent=1 // pred_fallthru
      _
    // Predicated region
    $region10: #{tpu_custom_call.1} parent=1 // pred_check
      _
    $region11: #{tpu_custom_call.1} parent=1 // pred_check_branch
      %45 = sbr.rel (0) target = $region13
    $region12: #{tpu_custom_call.1} parent=1 // pred_region
      %47 = vsyncadd [#allocation8], 0
      %s48 = sshll.u32 %s2, 4
      %s49 = int_to_ptr.hbm [resolvable:$true] %s48
      %s50 = sshll.u32 [#allocation9], 4
      %s51 = int_to_ptr.vmem [resolvable:$true] %s50
      %56 = dma.hbm_to_vmem [thread:$0]  %s49, 1024, %s51, [#allocation8], 64, 64, 4
    $region13: #{tpu_custom_call.1} parent=1 // pred_fallthru
      _
    // Predicated region
    $region14: #{tpu_custom_call.1} parent=1 // pred_check
      _
    $region15: #{tpu_custom_call.1} parent=1 // pred_check_branch
      %58 = sbr.rel (0) target = $region17
    $region16: #{tpu_custom_call.1} parent=1 // pred_region
      _
    $region17: #{tpu_custom_call.1} parent=1 // pred_fallthru
      _
    // Predicated region
    $region18: #{tpu_custom_call.1} parent=1 // pred_check
      _
    $region19: #{tpu_custom_call.1} parent=1 // pred_check_branch
      %60 = sbr.rel (0) target = $region21
    $region20: #{tpu_custom_call.1} parent=1 // pred_region
      %62 = vsyncadd [#allocation11], 0
      %s63 = sshll.u32 %s4, 4
      %s64 = int_to_ptr.hbm [resolvable:$true] %s63
      %s65 = sshll.u32 [#allocation10], 4
      %s66 = int_to_ptr.vmem [resolvable:$true] %s65
      %71 = dma.hbm_to_vmem [thread:$0]  %s64, 1024, %s66, [#allocation11], 64, 64, 4
    $region21: #{tpu_custom_call.1} parent=1 // pred_fallthru
      _
    // Predicated region
    $region22: #{tpu_custom_call.1} parent=1 // pred_check
      _
    $region23: #{tpu_custom_call.1} parent=1 // pred_check_branch
      %73 = sbr.rel (0) target = $region25
    $region24: #{tpu_custom_call.1} parent=1 // pred_region
      %75 = vsyncadd [#allocation6], 0
      %s77 = sshll.u32 %s5, 4
      %s78 = int_to_ptr.vmem [resolvable:$true] %s77
      %80 = dma.vmem_to_smem %s78, 16, [#allocation12], [#allocation6]
    $region25: #{tpu_custom_call.1} parent=1 // pred_fallthru
      _
    // Predicated region
    $region26: #{tpu_custom_call.1} parent=1 // pred_check
      _
    $region27: #{tpu_custom_call.1} parent=1 // pred_check_branch
      %82 = sbr.rel (0) target = $region29
    $region28: #{tpu_custom_call.1} parent=1 // pred_region
      %84 = vsyncadd [#allocation14], 0
      %s86 = sshll.u32 %s6, 4
      %s87 = int_to_ptr.vmem [resolvable:$true] %s86
      %89 = dma.vmem_to_smem %s87, 16, [#allocation13], [#allocation14]
    $region29: #{tpu_custom_call.1} parent=1 // pred_fallthru
      _
    // Predicated region
    $region30: #{tpu_custom_call.1} parent=1 // pred_check
      _
    $region31: #{tpu_custom_call.1} parent=1 // pred_check_branch
      %91 = sbr.rel (0) target = $region33
    $region32: #{tpu_custom_call.1} parent=1 // pred_region
      %93 = vsyncadd [#allocation11], 0
      %s94 = sshll.u32 %s7, 4
      %s95 = int_to_ptr.hbm [resolvable:$true] %s94
      %s96 = sshll.u32 [#allocation15], 4
      %s97 = int_to_ptr.vmem [resolvable:$true] %s96
      %102 = dma.hbm_to_vmem [thread:$0]  %s95, 2048, %s97, [#allocation11], 64, 64, 4
    $region33: #{tpu_custom_call.1} parent=1 // pred_fallthru
      _
    // Predicated region
    $region34: #{tpu_custom_call.1} parent=1 // pred_check
      _
    $region35: #{tpu_custom_call.1} parent=1 // pred_check_branch
      %104 = sbr.rel (0) target = $region37
    $region36: #{tpu_custom_call.1} parent=1 // pred_region
      _
    $region37: #{tpu_custom_call.1} parent=1 // pred_fallthru
      _
    // Predicated region
    $region38: #{tpu_custom_call.1} parent=1 // pred_check
      _
    $region39: #{tpu_custom_call.1} parent=1 // pred_check_branch
      %106 = sbr.rel (0) target = $region41
    $region40: #{tpu_custom_call.1} parent=1 // pred_region
      %108 = dma.done [#allocation4], 1024
    $region41: #{tpu_custom_call.1} parent=1 // pred_fallthru
      _
    // Predicated region
    $region42: #{tpu_custom_call.1} parent=1 // pred_check
      _
    $region43: #{tpu_custom_call.1} parent=1 // pred_check_branch
      %110 = sbr.rel (0) target = $region45
    $region44: #{tpu_custom_call.1} parent=1 // pred_region
      %112 = dma.done [#allocation8], 128
    $region45: #{tpu_custom_call.1} parent=1 // pred_fallthru
      _
    // Predicated region
    $region46: #{tpu_custom_call.1} parent=1 // pred_check
      _
    $region47: #{tpu_custom_call.1} parent=1 // pred_check_branch
      %114 = sbr.rel (0) target = $region49
    $region48: #{tpu_custom_call.1} parent=1 // pred_region
      %116 = dma.done [#allocation8], 1024
    $region49: #{tpu_custom_call.1} parent=1 // pred_fallthru
      _
    // Predicated region
    $region50: #{tpu_custom_call.1} parent=1 // pred_check
      _
    $region51: #{tpu_custom_call.1} parent=1 // pred_check_branch
      %118 = sbr.rel (0) target = $region53
    $region52: #{tpu_custom_call.1} parent=1 // pred_region
      %120 = dma.done [#allocation11], 1024
    $region53: #{tpu_custom_call.1} parent=1 // pred_fallthru
      _
    // Predicated region
    $region54: #{tpu_custom_call.1} parent=1 // pred_check
      _
    $region55: #{tpu_custom_call.1} parent=1 // pred_check_branch
      %122 = sbr.rel (0) target = $region57
    $region56: #{tpu_custom_call.1} parent=1 // pred_region
      %124 = dma.done [#allocation6], 16
    $region57: #{tpu_custom_call.1} parent=1 // pred_fallthru
      _
    // Predicated region
    $region58: #{tpu_custom_call.1} parent=1 // pred_check
      _
    $region59: #{tpu_custom_call.1} parent=1 // pred_check_branch
      %126 = sbr.rel (0) target = $region61
    $region60: #{tpu_custom_call.1} parent=1 // pred_region
      %128 = dma.done [#allocation14], 16
    $region61: #{tpu_custom_call.1} parent=1 // pred_fallthru
      _
    // Predicated region
    $region62: #{tpu_custom_call.1} parent=1 // pred_check
      _
    $region63: #{tpu_custom_call.1} parent=1 // pred_check_branch
      %130 = sbr.rel (0) target = $region65
    $region64: #{tpu_custom_call.1} parent=1 // pred_region
      %132 = dma.done [#allocation11], 2048
    $region65: #{tpu_custom_call.1} parent=1 // pred_fallthru
      _
    %133 = sfence
    %p134 = scmp.eq.s32.totalorder 0, 0
    // Predicated region
    $region66: #{tpu_custom_call.1} parent=1 // pred_check
      %p135 = pneg %p134
    $region67: #{tpu_custom_call.1} parent=1 // pred_check_branch
      %137 = sbr.rel (%p135) target = $region69
    $region68: #{tpu_custom_call.1} parent=1 // pred_region
      %138 = vst [vmem:[#allocation2] sm:$0xff] 0.0
    $region69: #{tpu_custom_call.1} parent=1 // pred_fallthru
      _
    %v139 = vld [vmem:[#allocation3] sm:$0xff]
    %v140 = vld [vmem:[#allocation3 + $0x8] sm:$0xff]
    %v141 = vld [vmem:[#allocation3 + $0x10] sm:$0xff]
    %v142 = vld [vmem:[#allocation3 + $0x18] sm:$0xff]
    %v143 = vld [vmem:[#allocation3 + $0x20] sm:$0xff]
    %v144 = vld [vmem:[#allocation3 + $0x28] sm:$0xff]
    %v145 = vld [vmem:[#allocation3 + $0x30] sm:$0xff]
    %v146 = vld [vmem:[#allocation3 + $0x38] sm:$0xff]
    %v147 = vld [vmem:[#allocation7] sm:$0xff]
    %v148 = vmul.f32 %v139, %v147
    %v149 = vmul.f32 %v140, %v147
    %v150 = vmul.f32 %v141, %v147
    %v151 = vmul.f32 %v142, %v147
    %v152 = vmul.f32 %v143, %v147
    %v153 = vmul.f32 %v144, %v147
    %v154 = vmul.f32 %v145, %v147
    %v155 = vmul.f32 %v146, %v147
    %v156 = vrot.slane %v148, 4
    %v157 = vadd.f32 %v148, %v156
    %v158 = vrot.slane %v157, 2
    %v159 = vadd.f32 %v157, %v158
    %v160 = vrot.slane %v159, 1
    %v161 = vadd.f32 %v159, %v160
    %v162 = vrot.slane %v149, 4
    %v163 = vadd.f32 %v149, %v162
    %v164 = vrot.slane %v163, 2
    %v165 = vadd.f32 %v163, %v164
    %v166 = vrot.slane %v165, 1
    %v167 = vadd.f32 %v165, %v166
    %v168 = vrot.slane %v150, 4
    %v169 = vadd.f32 %v150, %v168
    %v170 = vrot.slane %v169, 2
    %v171 = vadd.f32 %v169, %v170
    %v172 = vrot.slane %v171, 1
    %v173 = vadd.f32 %v171, %v172
    %v174 = vrot.slane %v151, 4
    %v175 = vadd.f32 %v151, %v174
    %v176 = vrot.slane %v175, 2
    %v177 = vadd.f32 %v175, %v176
    %v178 = vrot.slane %v177, 1
    %v179 = vadd.f32 %v177, %v178
    %v180 = vrot.slane %v152, 4
    %v181 = vadd.f32 %v152, %v180
    %v182 = vrot.slane %v181, 2
    %v183 = vadd.f32 %v181, %v182
    %v184 = vrot.slane %v183, 1
    %v185 = vadd.f32 %v183, %v184
    %v186 = vrot.slane %v153, 4
    %v187 = vadd.f32 %v153, %v186
    %v188 = vrot.slane %v187, 2
    %v189 = vadd.f32 %v187, %v188
    %v190 = vrot.slane %v189, 1
    %v191 = vadd.f32 %v189, %v190
    %v192 = vrot.slane %v154, 4
    %v193 = vadd.f32 %v154, %v192
    %v194 = vrot.slane %v193, 2
    %v195 = vadd.f32 %v193, %v194
    %v196 = vrot.slane %v195, 1
    %v197 = vadd.f32 %v195, %v196
    %v198 = vrot.slane %v155, 4
    %v199 = vadd.f32 %v155, %v198
    %v200 = vrot.slane %v199, 2
    %v201 = vadd.f32 %v199, %v200
    %v202 = vrot.slane %v201, 1
    %v203 = vadd.f32 %v201, %v202
    %v204 = vld [vmem:[#allocation2] sm:$0xff]
    %v205 = vpack.c.bf16 %v161, %v161
    %v206 = vpack.c.bf16 %v167, %v167
    %v207 = vpack.c.bf16 %v173, %v173
    %v208 = vpack.c.bf16 %v179, %v179
    %v209 = vpack.c.bf16 %v185, %v185
    %v210 = vpack.c.bf16 %v191, %v191
    %v211 = vpack.c.bf16 %v197, %v197
    %v212 = vpack.c.bf16 %v203, %v203
    %v213 = vld [vmem:[#allocation9] sm:$0xf]
    %v214 = vld [vmem:[#allocation9 + $0x4] sm:$0xf]
    %v215 = vld [vmem:[#allocation9 + $0x8] sm:$0xf]
    %v216 = vld [vmem:[#allocation9 + $0xc] sm:$0xf]
    %v217 = vld [vmem:[#allocation9 + $0x10] sm:$0xf]
    %v218 = vld [vmem:[#allocation9 + $0x14] sm:$0xf]
    %v219 = vld [vmem:[#allocation9 + $0x18] sm:$0xf]
    %v220 = vld [vmem:[#allocation9 + $0x1c] sm:$0xf]
    %v221 = vld [vmem:[#allocation9 + $0x20] sm:$0xf]
    %v222 = vld [vmem:[#allocation9 + $0x24] sm:$0xf]
    %v223 = vld [vmem:[#allocation9 + $0x28] sm:$0xf]
    %v224 = vld [vmem:[#allocation9 + $0x2c] sm:$0xf]
    %v225 = vld [vmem:[#allocation9 + $0x30] sm:$0xf]
    %v226 = vld [vmem:[#allocation9 + $0x34] sm:$0xf]
    %v227 = vld [vmem:[#allocation9 + $0x38] sm:$0xf]
    %v228 = vld [vmem:[#allocation9 + $0x3c] sm:$0xf]
    %v237 = vunpack.c.l.b16 %v205
    %v238 = vunpack.c.l.b16 %v206
    %v239 = vunpack.c.l.b16 %v207
    %v240 = vunpack.c.l.b16 %v208
    %v241 = vunpack.c.l.b16 %v209
    %v242 = vunpack.c.l.b16 %v210
    %v243 = vunpack.c.l.b16 %v211
    %v244 = vunpack.c.l.b16 %v212
    %vm245 = vcmask 1041409
    %v246 = vsel %vm245, %v238, %v237
    %vm247 = vcmask 1042434
    %v248 = vsel %vm247, %v239, %v246
    %vm249 = vcmask 1043459
    %v250 = vsel %vm249, %v240, %v248
    %vm251 = vcmask 1044484
    %v252 = vsel %vm251, %v241, %v250
    %vm253 = vcmask 1045509
    %v254 = vsel %vm253, %v242, %v252
    %vm255 = vcmask 1046534
    %v256 = vsel %vm255, %v243, %v254
    %vm257 = vcmask 1047559
    %v258 = vsel %vm257, %v244, %v256
    %v259 = vpack.c.b16 %v258, %v258
    %v277 = vunpack.c.l.b16 %v213
    %v278 = vunpack.c.l.b16 %v214
    %v279 = vunpack.c.l.b16 %v215
    %v280 = vunpack.c.l.b16 %v216
    %v281 = vunpack.c.l.b16 %v217
    %v282 = vunpack.c.l.b16 %v218
    %v283 = vunpack.c.l.b16 %v219
    %v284 = vunpack.c.l.b16 %v220
    %v285 = vunpack.c.l.b16 %v221
    %v286 = vunpack.c.l.b16 %v222
    %v287 = vunpack.c.l.b16 %v223
    %v288 = vunpack.c.l.b16 %v224
    %v289 = vunpack.c.l.b16 %v225
    %v290 = vunpack.c.l.b16 %v226
    %v291 = vunpack.c.l.b16 %v227
    %v292 = vunpack.c.l.b16 %v228
    %v293 = vpack.c.b16 %v278, %v277
    %v294 = vpack.c.b16 %v280, %v279
    %v295 = vpack.c.b16 %v282, %v281
    %v296 = vpack.c.b16 %v284, %v283
    %v297 = vpack.c.b16 %v286, %v285
    %v298 = vpack.c.b16 %v288, %v287
    %v299 = vpack.c.b16 %v290, %v289
    %v300 = vpack.c.b16 %v292, %v291
    %309 = vmatpush.bf16.msra.mxu0 %v300
    %310 = vmatpush.bf16.msra.mxu0 %v299
    %311 = vmatpush.bf16.msra.mxu0 %v298
    %312 = vmatpush.bf16.msra.mxu0 %v297
    %313 = vmatpush.bf16.msra.mxu0 %v296
    %314 = vmatpush.bf16.msra.mxu0 %v295
    %315 = vmatpush.bf16.msra.mxu0 %v294
    %316 = vmatpush.bf16.msra.mxu0 %v293
    %317 = vmatmul.bf16.gmra.mxu0 %v259
    %v318 = vpop.f32.mrf.mxu0
    %v319 = vadd.f32 0.0, %v318
    %v320 = vpop.f32.mrf.mxu0
    %321 = vdwg.mxu0
    %v322 = vadd.f32 %v204, %v319
    %323 = vst [vmem:[#allocation2] sm:$0xff] %v322
    // Predicated region
    $region70: #{tpu_custom_call.1} parent=1 // pred_check
      %p324 = pneg %p134
    $region71: #{tpu_custom_call.1} parent=1 // pred_check_branch
      %326 = sbr.rel (%p324) target = $region73
    $region72: #{tpu_custom_call.1} parent=1 // pred_region
      %v327 = vld [vmem:[#allocation2] sm:$0xff]
      %v328 = vld [vmem:[%s3] sm:$0x1]
      %v330 = vperm.slane %v328, 0
      %v332 = vadd.f32 %v327, %v330
      %v333 = vmax.f32 %v332, 0.0
      %v334 = vpack.c.bf16 %v333, %v333
      %v335 = vld [vmem:[#allocation10] sm:$0xf]
      %v336 = vld [vmem:[#allocation10 + $0x4] sm:$0xf]
      %v337 = vld [vmem:[#allocation10 + $0x8] sm:$0xf]
      %v338 = vld [vmem:[#allocation10 + $0xc] sm:$0xf]
      %v339 = vld [vmem:[#allocation10 + $0x10] sm:$0xf]
      %v340 = vld [vmem:[#allocation10 + $0x14] sm:$0xf]
      %v341 = vld [vmem:[#allocation10 + $0x18] sm:$0xf]
      %v342 = vld [vmem:[#allocation10 + $0x1c] sm:$0xf]
      %v343 = vld [vmem:[#allocation10 + $0x20] sm:$0xf]
      %v344 = vld [vmem:[#allocation10 + $0x24] sm:$0xf]
      %v345 = vld [vmem:[#allocation10 + $0x28] sm:$0xf]
      %v346 = vld [vmem:[#allocation10 + $0x2c] sm:$0xf]
      %v347 = vld [vmem:[#allocation10 + $0x30] sm:$0xf]
      %v348 = vld [vmem:[#allocation10 + $0x34] sm:$0xf]
      %v349 = vld [vmem:[#allocation10 + $0x38] sm:$0xf]
      %v350 = vld [vmem:[#allocation10 + $0x3c] sm:$0xf]
      %v367 = vunpack.c.l.b16 %v335
      %v368 = vunpack.c.l.b16 %v336
      %v369 = vunpack.c.l.b16 %v337
      %v370 = vunpack.c.l.b16 %v338
      %v371 = vunpack.c.l.b16 %v339
      %v372 = vunpack.c.l.b16 %v340
      %v373 = vunpack.c.l.b16 %v341
      %v374 = vunpack.c.l.b16 %v342
      %v375 = vunpack.c.l.b16 %v343
      %v376 = vunpack.c.l.b16 %v344
      %v377 = vunpack.c.l.b16 %v345
      %v378 = vunpack.c.l.b16 %v346
      %v379 = vunpack.c.l.b16 %v347
      %v380 = vunpack.c.l.b16 %v348
      %v381 = vunpack.c.l.b16 %v349
      %v382 = vunpack.c.l.b16 %v350
      %v383 = vpack.c.b16 %v368, %v367
      %v384 = vpack.c.b16 %v370, %v369
      %v385 = vpack.c.b16 %v372, %v371
      %v386 = vpack.c.b16 %v374, %v373
      %v387 = vpack.c.b16 %v376, %v375
      %v388 = vpack.c.b16 %v378, %v377
      %v389 = vpack.c.b16 %v380, %v379
      %v390 = vpack.c.b16 %v382, %v381
      %399 = vmatpush.bf16.msra.mxu0 %v390
      %400 = vmatpush.bf16.msra.mxu0 %v389
      %401 = vmatpush.bf16.msra.mxu0 %v388
      %402 = vmatpush.bf16.msra.mxu0 %v387
      %403 = vmatpush.bf16.msra.mxu0 %v386
      %404 = vmatpush.bf16.msra.mxu0 %v385
      %405 = vmatpush.bf16.msra.mxu0 %v384
      %406 = vmatpush.bf16.msra.mxu0 %v383
      %407 = vmatmul.bf16.gmra.mxu0 %v334
      %v408 = vpop.f32.mrf.mxu0
      %v409 = vadd.f32 0.0, %v408
      %v410 = vpop.f32.mrf.mxu0
      %411 = vdwg.mxu0
      %v412 = vld [vmem:[%s8] sm:$0x1]
      %s413 = sld [smem:[#allocation12]]
      %v414 = vstv %s413
      %v415 = vmul.f32 %v409, %v414
      %s416 = sld [smem:[#allocation13]]
      %v417 = vstv %s416
      %v418 = vadd.f32 %v415, %v417
      %v419 = vmax.f32 %v418, 0.0
      %v420 = vpack.c.bf16 %v419, %v419
      %v421 = vld [vmem:[#allocation15] sm:$0xf]
      %v422 = vld [vmem:[#allocation15 + $0x4] sm:$0xf]
      %v423 = vld [vmem:[#allocation15 + $0x8] sm:$0xf]
      %v424 = vld [vmem:[#allocation15 + $0xc] sm:$0xf]
      %v425 = vld [vmem:[#allocation15 + $0x10] sm:$0xf]
      %v426 = vld [vmem:[#allocation15 + $0x14] sm:$0xf]
      %v427 = vld [vmem:[#allocation15 + $0x18] sm:$0xf]
      %v428 = vld [vmem:[#allocation15 + $0x1c] sm:$0xf]
      %v429 = vld [vmem:[#allocation15 + $0x20] sm:$0xf]
      %v430 = vld [vmem:[#allocation15 + $0x24] sm:$0xf]
      %v431 = vld [vmem:[#allocation15 + $0x28] sm:$0xf]
      %v432 = vld [vmem:[#allocation15 + $0x2c] sm:$0xf]
      %v433 = vld [vmem:[#allocation15 + $0x30] sm:$0xf]
      %v434 = vld [vmem:[#allocation15 + $0x34] sm:$0xf]
      %v435 = vld [vmem:[#allocation15 + $0x38] sm:$0xf]
      %v436 = vld [vmem:[#allocation15 + $0x3c] sm:$0xf]
      %v453 = vunpack.c.l.b16 %v421
      %v454 = vunpack.c.l.b16 %v422
      %v455 = vunpack.c.l.b16 %v423
      %v456 = vunpack.c.l.b16 %v424
      %v457 = vunpack.c.l.b16 %v425
      %v458 = vunpack.c.l.b16 %v426
      %v459 = vunpack.c.l.b16 %v427
      %v460 = vunpack.c.l.b16 %v428
      %v461 = vunpack.c.l.b16 %v429
      %v462 = vunpack.c.l.b16 %v430
      %v463 = vunpack.c.l.b16 %v431
      %v464 = vunpack.c.l.b16 %v432
      %v465 = vunpack.c.l.b16 %v433
      %v466 = vunpack.c.l.b16 %v434
      %v467 = vunpack.c.l.b16 %v435
      %v468 = vunpack.c.l.b16 %v436
      %v469 = vpack.c.b16 %v454, %v453
      %v470 = vpack.c.b16 %v456, %v455
      %v471 = vpack.c.b16 %v458, %v457
      %v472 = vpack.c.b16 %v460, %v459
      %v473 = vpack.c.b16 %v462, %v461
      %v474 = vpack.c.b16 %v464, %v463
      %v475 = vpack.c.b16 %v466, %v465
      %v476 = vpack.c.b16 %v468, %v467
      %485 = vmatpush.bf16.msra.mxu0 %v476
      %486 = vmatpush.bf16.msra.mxu0 %v475
      %487 = vmatpush.bf16.msra.mxu0 %v474
      %488 = vmatpush.bf16.msra.mxu0 %v473
      %489 = vmatpush.bf16.msra.mxu0 %v472
      %490 = vmatpush.bf16.msra.mxu0 %v471
      %491 = vmatpush.bf16.msra.mxu0 %v470
      %492 = vmatpush.bf16.msra.mxu0 %v469
      %493 = vmatmul.bf16.gmra.mxu0 %v420
      %v494 = vpop.f32.mrf.mxu0
      %v495 = vadd.f32 0.0, %v494
      %v496 = vpop.f32.mrf.mxu0
      %497 = vdwg.mxu0
      %v499 = vperm.slane %v412, 0
      %v501 = vadd.f32 %v499, %v495
      %s502 = sld [smem:[#allocation12 + $0x1]]
      %v503 = vstv %s502
      %v504 = vmul.f32 %v409, %v503
      %s505 = sld [smem:[#allocation13 + $0x1]]
      %v506 = vstv %s505
      %v507 = vadd.f32 %v504, %v506
      %v508 = vmax.f32 %v507, 0.0
      %v509 = vpack.c.bf16 %v508, %v508
      %v510 = vld [vmem:[#allocation15 + $0x40] sm:$0xf]
      %v511 = vld [vmem:[#allocation15 + $0x44] sm:$0xf]
      %v512 = vld [vmem:[#allocation15 + $0x48] sm:$0xf]
      %v513 = vld [vmem:[#allocation15 + $0x4c] sm:$0xf]
      %v514 = vld [vmem:[#allocation15 + $0x50] sm:$0xf]
      %v515 = vld [vmem:[#allocation15 + $0x54] sm:$0xf]
      %v516 = vld [vmem:[#allocation15 + $0x58] sm:$0xf]
      %v517 = vld [vmem:[#allocation15 + $0x5c] sm:$0xf]
      %v518 = vld [vmem:[#allocation15 + $0x60] sm:$0xf]
      %v519 = vld [vmem:[#allocation15 + $0x64] sm:$0xf]
      %v520 = vld [vmem:[#allocation15 + $0x68] sm:$0xf]
      %v521 = vld [vmem:[#allocation15 + $0x6c] sm:$0xf]
      %v522 = vld [vmem:[#allocation15 + $0x70] sm:$0xf]
      %v523 = vld [vmem:[#allocation15 + $0x74] sm:$0xf]
      %v524 = vld [vmem:[#allocation15 + $0x78] sm:$0xf]
      %v525 = vld [vmem:[#allocation15 + $0x7c] sm:$0xf]
      %v542 = vunpack.c.l.b16 %v510
      %v543 = vunpack.c.l.b16 %v511
      %v544 = vunpack.c.l.b16 %v512
      %v545 = vunpack.c.l.b16 %v513
      %v546 = vunpack.c.l.b16 %v514
      %v547 = vunpack.c.l.b16 %v515
      %v548 = vunpack.c.l.b16 %v516
      %v549 = vunpack.c.l.b16 %v517
      %v550 = vunpack.c.l.b16 %v518
      %v551 = vunpack.c.l.b16 %v519
      %v552 = vunpack.c.l.b16 %v520
      %v553 = vunpack.c.l.b16 %v521
      %v554 = vunpack.c.l.b16 %v522
      %v555 = vunpack.c.l.b16 %v523
      %v556 = vunpack.c.l.b16 %v524
      %v557 = vunpack.c.l.b16 %v525
      %v558 = vpack.c.b16 %v543, %v542
      %v559 = vpack.c.b16 %v545, %v544
      %v560 = vpack.c.b16 %v547, %v546
      %v561 = vpack.c.b16 %v549, %v548
      %v562 = vpack.c.b16 %v551, %v550
      %v563 = vpack.c.b16 %v553, %v552
      %v564 = vpack.c.b16 %v555, %v554
      %v565 = vpack.c.b16 %v557, %v556
      %574 = vmatpush.bf16.msra.mxu0 %v565
      %575 = vmatpush.bf16.msra.mxu0 %v564
      %576 = vmatpush.bf16.msra.mxu0 %v563
      %577 = vmatpush.bf16.msra.mxu0 %v562
      %578 = vmatpush.bf16.msra.mxu0 %v561
      %579 = vmatpush.bf16.msra.mxu0 %v560
      %580 = vmatpush.bf16.msra.mxu0 %v559
      %581 = vmatpush.bf16.msra.mxu0 %v558
      %582 = vmatmul.bf16.gmra.mxu0 %v509
      %v583 = vpop.f32.mrf.mxu0
      %v584 = vadd.f32 0.0, %v583
      %v585 = vpop.f32.mrf.mxu0
      %586 = vdwg.mxu0
      %v587 = vadd.f32 %v501, %v584
      %588 = vst [vmem:[#allocation16] sm:$0xff] %v587
    $region73: #{tpu_custom_call.1} parent=1 // pred_fallthru
      _
    // Predicated region
    $region74: #{tpu_custom_call.1} parent=1 // pred_check
      _
    $region75: #{tpu_custom_call.1} parent=1 // pred_check_branch
      %590 = sbr.rel (0) target = $region77
    $region76: #{tpu_custom_call.1} parent=1 // pred_region
      %592 = vsyncadd [#allocation5], 0
      %s594 = sshll.u32 [#allocation16], 4
      %s595 = int_to_ptr.vmem [resolvable:$true] %s594
      %s596 = sshll.u32 %s9, 4
      %s597 = int_to_ptr.hbm [resolvable:$true] %s596
      %599 = dma.vmem_to_hbm [thread:$0]  %s595, 128, %s597, [#allocation5]
    $region77: #{tpu_custom_call.1} parent=1 // pred_fallthru
      _
    // Predicated region
    $region78: #{tpu_custom_call.1} parent=1 // pred_check
      _
    $region79: #{tpu_custom_call.1} parent=1 // pred_check_branch
      %601 = sbr.rel (0) target = $region81
    $region80: #{tpu_custom_call.1} parent=1 // pred_region
      %603 = dma.done [#allocation5], 128
    $region81: #{tpu_custom_call.1} parent=1 // pred_fallthru
      _
    %604 = vsyncpa [#allocation4], 1
    %605 = vsyncpa [#allocation8], 1
    %606 = vsyncpa [#allocation11], 1
    %607 = vsyncpa [#allocation5], 1
    %608 = vsyncpa [#allocation6], 1
    %609 = vsyncpa [#allocation14], 1

</llo_original>
